<compile_context>
chip_gen: v7x
topology: tpu7x:2x2x1
jax: 0.10.0
libtpu: 0.0.40
codegen_flags: <defaults>
</compile_context>

<pallas_src>
import jax
import jax.numpy as jnp
from jax import lax
from jax.experimental import pallas as pl
from jax.experimental.pallas import tpu as pltpu

START_TAG_IDX = 3   # tag_to_ix['<START>']
STOP_TAG_IDX = 4    # tag_to_ix['<STOP>']
NEG_INF = -10000.0
TAG_PAD = 128       # lane-padded tag dimension


# ----------------------------------------------------------------------------
# Fused kernel: BiLSTM + hidden2tag + Viterbi + backpointer walk
# ----------------------------------------------------------------------------
def bilstm_crf_kernel(x_ref,                              # (S, E)
                      wihf_ref, wihb_ref,                 # (E, 8H) each (fwd/bwd lanes, zeros elsewhere)
                      whh_ref, b_ref,                     # (2H, 8H) block-diag, (1, 8H)
                      h0_ref, c0_ref,                     # (1, 2H) each, [fwd | bwd]
                      w2tf_ref, w2tb_ref, b2t_ref,        # (H, TP), (H, TP), (1, TP)
                      transT_ref,                         # (T, TP)  [prev, next], pad = NEG_INF
                      score_ref, start_ref, path_ref,     # (1,1) f32, (1,1) i32, (S, TP) i32
                      xpf_scr, xpb_scr,                   # (S, 8H) each
                      hf_scr, hb_scr,                     # (S, H) each
                      feats_scr, bptr_scr):               # (S, TP) f32, (S, TP) i32
    S = x_ref.shape[0]
    H = hf_scr.shape[1]
    T = transT_ref.shape[0]
    TP = feats_scr.shape[1]

    # ---- input projections (both directions), hoisted out of the recurrence ----
    x = x_ref[...]
    xpf_scr[...] = jnp.dot(x, wihf_ref[...], preferred_element_type=jnp.float32)
    xpb_scr[...] = jnp.dot(x, wihb_ref[...], preferred_element_type=jnp.float32)

    whh = whh_ref[...]            # (2H, 8H), block-diagonal recurrent weights
    bias = b_ref[...]             # (1, 8H)

    # ---- fused bidirectional LSTM recurrence (fwd handles t=k, bwd handles t=S-1-k) ----
    # gate lane layout: [i_f, i_b, f_f, f_b, g_f, g_b, o_f, o_b], each H lanes wide
    h = h0_ref[...]               # (1, 2H)  [h_fwd | h_bwd]
    c = c0_ref[...]               # (1, 2H)
    for k in range(S):            # fully unrolled (S static)
        tb = S - 1 - k
        gates = (xpf_scr[pl.ds(k, 1), :]
                 + xpb_scr[pl.ds(tb, 1), :]
                 + jnp.dot(h, whh, preferred_element_type=jnp.float32)
                 + bias)                               # (1, 8H)
        i_g = jax.nn.sigmoid(gates[:, 0:2 * H])
        f_g = jax.nn.sigmoid(gates[:, 2 * H:4 * H])
        g_g = jnp.tanh(gates[:, 4 * H:6 * H])
        o_g = jax.nn.sigmoid(gates[:, 6 * H:8 * H])
        c = f_g * c + i_g * g_g
        h = o_g * jnp.tanh(c)
        hf_scr[pl.ds(k, 1), :] = h[:, 0:H]
        hb_scr[pl.ds(tb, 1), :] = h[:, H:2 * H]

    # ---- hidden2tag: concat([h_fwd, h_bwd]) @ W.T + b == hf @ Wf + hb @ Wb + b ----
    feats_scr[...] = (jnp.dot(hf_scr[...], w2tf_ref[...], preferred_element_type=jnp.float32)
                      + jnp.dot(hb_scr[...], w2tb_ref[...], preferred_element_type=jnp.float32)
                      + b2t_ref[...])

    # ---- Viterbi forward recurrence (column carry over prev tags) ----
    transT = transT_ref[...]                                   # (T_prev, TP_next)
    prev_idx = lax.broadcasted_iota(jnp.int32, (T, TP), 0)     # prev index per element
    eye = (lax.broadcasted_iota(jnp.int32, (T, TP), 0)
           == lax.broadcasted_iota(jnp.int32, (T, TP), 1))
    lane_idx = lax.broadcasted_iota(jnp.int32, (1, TP), 1)
    col_idx = lax.broadcasted_iota(jnp.int32, (T, 1), 0)
    zeros_i = jnp.zeros((1, TP), jnp.int32)

    # init_vvars: -10000 everywhere except START
    fv = jnp.where(col_idx == START_TAG_IDX, 0.0, NEG_INF).astype(jnp.float32)   # (T, 1)

    for t in range(S):            # fully unrolled
        ntv = transT + fv                                      # (prev, next)
        vv = jnp.max(ntv, axis=0, keepdims=True)               # (1, TP) best per next
        best_prev = jnp.min(jnp.where(ntv == vv, prev_idx, T),
                            axis=0, keepdims=True)             # (1, TP) i32 (no transpose)
        bptr_scr[pl.ds(t, 1), :] = best_prev
        new_row = vv + feats_scr[pl.ds(t, 1), :]               # (1, TP)
        # single row -> column relayout for the next step's carry
        fv = jnp.sum(jnp.where(eye, new_row, 0.0), axis=1, keepdims=True)         # (T, 1)

    # ---- terminal transition into STOP ----
    terminal = fv + transT[:, STOP_TAG_IDX:STOP_TAG_IDX + 1]   # (T, 1)
    best_score = jnp.max(terminal, axis=0, keepdims=True)      # (1, 1)
    best_last = jnp.min(jnp.where(terminal == best_score, col_idx, T),
                        axis=0, keepdims=True)                 # (1, 1) i32
    score_ref[...] = best_score

    # ---- backpointer walk (lane-select, no data-dependent scalar indexing) ----
    cur = best_last + zeros_i                                  # (1, TP) tag broadcast over lanes
    for j in range(S):            # fully unrolled, walks t = S-1 .. 0
        t = S - 1 - j
        path_ref[pl.ds(t, 1), :] = cur
        row = bptr_scr[pl.ds(t, 1), :]
        nxt = jnp.sum(jnp.where(lane_idx == cur, row, 0), axis=1, keepdims=True)  # (1, 1)
        cur = nxt + zeros_i
    start_ref[...] = cur[:, 0:1]                               # must equal START tag


# ----------------------------------------------------------------------------
# JAX wrapper
# ----------------------------------------------------------------------------
def bilstm_crf_forward(sentence, pk):
    embeds = pk['embedding'][sentence]                 # (S, E) gather (plain-JAX glue)
    S = embeds.shape[0]
    H = pk['w2t_f_pad'].shape[0]
    TP = pk['transT_pad'].shape[1]
    G = 8 * H
    vmem = pl.BlockSpec(memory_space=pltpu.MemorySpace.VMEM)

    score, start, path = pl.pallas_call(
        bilstm_crf_kernel,
        out_shape=(jax.ShapeDtypeStruct((1, 1), jnp.float32),
                   jax.ShapeDtypeStruct((1, 1), jnp.int32),
                   jax.ShapeDtypeStruct((S, TP), jnp.int32)),
        in_specs=[vmem] * 11,
        out_specs=(vmem, vmem, vmem),
        scratch_shapes=[pltpu.VMEM((S, G), jnp.float32),   # xproj fwd
                        pltpu.VMEM((S, G), jnp.float32),   # xproj bwd
                        pltpu.VMEM((S, H), jnp.float32),   # h fwd per step
                        pltpu.VMEM((S, H), jnp.float32),   # h bwd per step
                        pltpu.VMEM((S, TP), jnp.float32),  # feats
                        pltpu.VMEM((S, TP), jnp.int32)],   # backpointers
    )(embeds,
      pk['wih_f_pack'], pk['wih_b_pack'], pk['whh_blk'], pk['b_pack'],
      pk['h_init'], pk['c_init'],
      pk['w2t_f_pad'], pk['w2t_b_pad'], pk['b2t_pad'],
      pk['transT_pad'])

    return score[0, 0], path[:, 0], start[0, 0]


# ----------------------------------------------------------------------------
# Deterministic parameter construction + packing into the fused layout
# ----------------------------------------------------------------------------
def make_params(key, vocab_size, E, H, T):
    ks = jax.random.split(key, 13)

    def n(k, shape, scale=0.1):
        return (scale * jax.random.normal(k, shape)).astype(jnp.float32)

    p = dict(
        embedding=n(ks[0], (vocab_size, E), 1.0),
        wih_f=n(ks[1], (4, E, H)), whh_f=n(ks[2], (4, H, H)), b_f=n(ks[3], (4, 1, H)),
        wih_b=n(ks[4], (4, E, H)), whh_b=n(ks[5], (4, H, H)), b_b=n(ks[6], (4, 1, H)),
        h0=n(ks[7], (2, 1, H), 1.0), c0=n(ks[8], (2, 1, H), 1.0),
        w2t_f=n(ks[9], (H, T)), w2t_b=n(ks[10], (H, T)), b2t=n(ks[11], (1, T)),
    )
    trans = jax.random.normal(ks[12], (T, T)).astype(jnp.float32)
    trans = trans.at[START_TAG_IDX, :].set(NEG_INF)   # never transition INTO START
    trans = trans.at[:, STOP_TAG_IDX].set(NEG_INF)    # never transition FROM STOP
    p['transitions'] = trans
    return p


def pack_params(p):
    """Pack per-gate / per-direction weights into the fused lane layout
    [i_f, i_b, f_f, f_b, g_f, g_b, o_f, o_b] (each block H lanes wide)."""
    E, H = p['wih_f'].shape[1], p['wih_f'].shape[2]
    T = p['transitions'].shape[0]
    G, TP = 8 * H, TAG_PAD

    wih_f_pack = jnp.zeros((E, G), jnp.float32)
    wih_b_pack = jnp.zeros((E, G), jnp.float32)
    whh_blk = jnp.zeros((2 * H, G), jnp.float32)
    b_pack = jnp.zeros((1, G), jnp.float32)
    for gi in range(4):                                  # gate order: i, f, g, o
        f0, b0 = (2 * gi) * H, (2 * gi + 1) * H          # fwd lanes, bwd lanes
        wih_f_pack = wih_f_pack.at[:, f0:f0 + H].set(p['wih_f'][gi])
        wih_b_pack = wih_b_pack.at[:, b0:b0 + H].set(p['wih_b'][gi])
        whh_blk = whh_blk.at[0:H, f0:f0 + H].set(p['whh_f'][gi])
        whh_blk = whh_blk.at[H:2 * H, b0:b0 + H].set(p['whh_b'][gi])
        b_pack = b_pack.at[:, f0:f0 + H].set(p['b_f'][gi])   # b = b_ih + b_hh pre-summed
        b_pack = b_pack.at[:, b0:b0 + H].set(p['b_b'][gi])

    return dict(
        embedding=p['embedding'],
        wih_f_pack=wih_f_pack, wih_b_pack=wih_b_pack, whh_blk=whh_blk, b_pack=b_pack,
        h_init=jnp.concatenate([p['h0'][0], p['h0'][1]], axis=1),   # (1, 2H)
        c_init=jnp.concatenate([p['c0'][0], p['c0'][1]], axis=1),   # (1, 2H)
        w2t_f_pad=jnp.zeros((H, TP), jnp.float32).at[:, :T].set(p['w2t_f']),
        w2t_b_pad=jnp.zeros((H, TP), jnp.float32).at[:, :T].set(p['w2t_b']),
        b2t_pad=jnp.zeros((1, TP), jnp.float32).at[:, :T].set(p['b2t']),
        transT_pad=jnp.full((T, TP), NEG_INF, jnp.float32).at[:, :T].set(p['transitions'].T),
    )


if __name__ == "__main__":
    vocab_size = 20
    embedding_dim = 16
    hidden_dim = 32          # bidirectional -> per-direction hidden = 16
    seq_len = 8
    tagset_size = 5          # {'B','I','O','<START>','<STOP>'}
    H = hidden_dim // 2

    key = jax.random.PRNGKey(0)
    k_params, k_sent = jax.random.split(key)
    params = make_params(k_params, vocab_size, embedding_dim, H, tagset_size)
    packed = pack_params(params)
    sentence = jax.random.randint(k_sent, (seq_len,), 0, vocab_size)

    score, tag_seq, start_tag = bilstm_crf_forward(sentence, packed)
    jax.block_until_ready((score, tag_seq, start_tag))

    # The popped start of the decoded path must be the START tag (as asserted in PyTorch).
    assert int(start_tag) == START_TAG_IDX
    assert tag_seq.shape == (seq_len,)
    assert bool(jnp.all((tag_seq >= 0) & (tag_seq < tagset_size)))

    print("KERNEL_OK")
</pallas_src>

<mosaic_0001>
module attributes {stable_mosaic.version = 11 : i64} {
  func.func @bilstm_crf_kernel(%arg0: memref<8x16xf32, #tpu.memory_space<vmem>>, %arg1: memref<16x128xf32, #tpu.memory_space<vmem>>, %arg2: memref<16x128xf32, #tpu.memory_space<vmem>>, %arg3: memref<32x128xf32, #tpu.memory_space<vmem>>, %arg4: memref<1x128xf32, #tpu.memory_space<vmem>>, %arg5: memref<1x32xf32, #tpu.memory_space<vmem>>, %arg6: memref<1x32xf32, #tpu.memory_space<vmem>>, %arg7: memref<16x128xf32, #tpu.memory_space<vmem>>, %arg8: memref<16x128xf32, #tpu.memory_space<vmem>>, %arg9: memref<1x128xf32, #tpu.memory_space<vmem>>, %arg10: memref<5x128xf32, #tpu.memory_space<vmem>>, %arg11: memref<1x1xf32, #tpu.memory_space<vmem>>, %arg12: memref<1x1xi32, #tpu.memory_space<vmem>>, %arg13: memref<8x128xi32, #tpu.memory_space<vmem>>, %arg14: memref<8x128xf32, #tpu.memory_space<vmem>>, %arg15: memref<8x128xf32, #tpu.memory_space<vmem>>, %arg16: memref<8x16xf32, #tpu.memory_space<vmem>>, %arg17: memref<8x16xf32, #tpu.memory_space<vmem>>, %arg18: memref<8x128xf32, #tpu.memory_space<vmem>>, %arg19: memref<8x128xi32, #tpu.memory_space<vmem>>) attributes {dimension_semantics = [], scalar_prefetch = 0 : i64, scratch_operands = 6 : i64, tpu.core_type = #tpu.core_type<tc>} {
    %c0 = arith.constant 0 : index
    %c0_0 = arith.constant 0 : index
    %0 = vector.load %arg0[%c0, %c0_0] : memref<8x16xf32, #tpu.memory_space<vmem>>, vector<8x16xf32>
    %c0_1 = arith.constant 0 : index
    %c0_2 = arith.constant 0 : index
    %1 = vector.load %arg1[%c0_1, %c0_2] : memref<16x128xf32, #tpu.memory_space<vmem>>, vector<16x128xf32>
    %cst = arith.constant dense<0.000000e+00> : vector<8x128xf32>
    %2 = tpu.matmul %0, %1, %cst {dimension_numbers = #tpu.dot_dimension_numbers<[1], [0], [0], [1], [0, 0, 1, 1], [], []>} : vector<8x16xf32>, vector<16x128xf32>, vector<8x128xf32> -> vector<8x128xf32>
    %c0_3 = arith.constant 0 : index
    %c0_4 = arith.constant 0 : index
    %3 = vector.load %arg14[%c0_3, %c0_4] : memref<8x128xf32, #tpu.memory_space<vmem>>, vector<8x128xf32>
    tpu.vector_store %arg14[%c0_3, %c0_4], %2 {strides = array<i32>} : memref<8x128xf32, #tpu.memory_space<vmem>>, vector<8x128xf32>,
    %c0_5 = arith.constant 0 : index
    %c0_6 = arith.constant 0 : index
    %4 = vector.load %arg2[%c0_5, %c0_6] : memref<16x128xf32, #tpu.memory_space<vmem>>, vector<16x128xf32>
    %cst_7 = arith.constant dense<0.000000e+00> : vector<8x128xf32>
    %5 = tpu.matmul %0, %4, %cst_7 {dimension_numbers = #tpu.dot_dimension_numbers<[1], [0], [0], [1], [0, 0, 1, 1], [], []>} : vector<8x16xf32>, vector<16x128xf32>, vector<8x128xf32> -> vector<8x128xf32>
    %c0_8 = arith.constant 0 : index
    %c0_9 = arith.constant 0 : index
    %6 = vector.load %arg15[%c0_8, %c0_9] : memref<8x128xf32, #tpu.memory_space<vmem>>, vector<8x128xf32>
    tpu.vector_store %arg15[%c0_8, %c0_9], %5 {strides = array<i32>} : memref<8x128xf32, #tpu.memory_space<vmem>>, vector<8x128xf32>,
    %c0_10 = arith.constant 0 : index
    %c0_11 = arith.constant 0 : index
    %7 = vector.load %arg3[%c0_10, %c0_11] : memref<32x128xf32, #tpu.memory_space<vmem>>, vector<32x128xf32>
    %c0_12 = arith.constant 0 : index
    %c0_13 = arith.constant 0 : index
    %8 = vector.load %arg4[%c0_12, %c0_13] : memref<1x128xf32, #tpu.memory_space<vmem>>, vector<1x128xf32>
    %c0_14 = arith.constant 0 : index
    %c0_15 = arith.constant 0 : index
    %9 = vector.load %arg5[%c0_14, %c0_15] : memref<1x32xf32, #tpu.memory_space<vmem>>, vector<1x32xf32>
    %c0_16 = arith.constant 0 : index
    %c0_17 = arith.constant 0 : index
    %10 = vector.load %arg6[%c0_16, %c0_17] : memref<1x32xf32, #tpu.memory_space<vmem>>, vector<1x32xf32>
    %c0_18 = arith.constant 0 : index
    %c0_19 = arith.constant 0 : index
    %11 = vector.load %arg14[%c0_18, %c0_19] : memref<8x128xf32, #tpu.memory_space<vmem>>, vector<1x128xf32>
    %c7 = arith.constant 7 : index
    %c0_20 = arith.constant 0 : index
    %12 = vector.load %arg15[%c7, %c0_20] : memref<8x128xf32, #tpu.memory_space<vmem>>, vector<1x128xf32>
    %13 = arith.addf %11, %12 : vector<1x128xf32>
    %cst_21 = arith.constant dense<0.000000e+00> : vector<1x128xf32>
    %14 = tpu.matmul %9, %7, %cst_21 {dimension_numbers = #tpu.dot_dimension_numbers<[1], [0], [0], [1], [0, 0, 1, 1], [], []>} : vector<1x32xf32>, vector<32x128xf32>, vector<1x128xf32> -> vector<1x128xf32>
    %15 = arith.addf %13, %14 : vector<1x128xf32>
    %16 = arith.addf %15, %8 : vector<1x128xf32>
    %17 = vector.extract_strided_slice %16 {offsets = [0, 0], sizes = [1, 32], strides = [1, 1]} : vector<1x128xf32> to vector<1x32xf32>
    %18 = arith.negf %17 : vector<1x32xf32>
    %19 = math.exp %18 : vector<1x32xf32>
    %cst_22 = arith.constant 1.000000e+00 : f32
    %20 = vector.broadcast %cst_22 : f32 to vector<1x32xf32>
    %21 = arith.addf %20, %19 : vector<1x32xf32>
    %22 = arith.divf %20, %21 : vector<1x32xf32>
    %23 = vector.extract_strided_slice %16 {offsets = [0, 32], sizes = [1, 32], strides = [1, 1]} : vector<1x128xf32> to vector<1x32xf32>
    %24 = arith.negf %23 : vector<1x32xf32>
    %25 = math.exp %24 : vector<1x32xf32>
    %cst_23 = arith.constant 1.000000e+00 : f32
    %26 = vector.broadcast %cst_23 : f32 to vector<1x32xf32>
    %27 = arith.addf %26, %25 : vector<1x32xf32>
    %28 = arith.divf %26, %27 : vector<1x32xf32>
    %29 = vector.extract_strided_slice %16 {offsets = [0, 64], sizes = [1, 32], strides = [1, 1]} : vector<1x128xf32> to vector<1x32xf32>
    %30 = math.tanh %29 : vector<1x32xf32>
    %31 = vector.extract_strided_slice %16 {offsets = [0, 96], sizes = [1, 32], strides = [1, 1]} : vector<1x128xf32> to vector<1x32xf32>
    %32 = arith.negf %31 : vector<1x32xf32>
    %33 = math.exp %32 : vector<1x32xf32>
    %cst_24 = arith.constant 1.000000e+00 : f32
    %34 = vector.broadcast %cst_24 : f32 to vector<1x32xf32>
    %35 = arith.addf %34, %33 : vector<1x32xf32>
    %36 = arith.divf %34, %35 : vector<1x32xf32>
    %37 = arith.mulf %28, %10 : vector<1x32xf32>
    %38 = arith.mulf %22, %30 : vector<1x32xf32>
    %39 = arith.addf %37, %38 : vector<1x32xf32>
    %40 = math.tanh %39 : vector<1x32xf32>
    %41 = arith.mulf %36, %40 : vector<1x32xf32>
    %42 = vector.extract_strided_slice %41 {offsets = [0, 0], sizes = [1, 16], strides = [1, 1]} : vector<1x32xf32> to vector<1x16xf32>
    %c0_25 = arith.constant 0 : index
    %c0_26 = arith.constant 0 : index
    %43 = vector.load %arg16[%c0_25, %c0_26] : memref<8x16xf32, #tpu.memory_space<vmem>>, vector<1x16xf32>
    tpu.vector_store %arg16[%c0_25, %c0_26], %42 {strides = array<i32>} : memref<8x16xf32, #tpu.memory_space<vmem>>, vector<1x16xf32>,
    %44 = vector.extract_strided_slice %41 {offsets = [0, 16], sizes = [1, 16], strides = [1, 1]} : vector<1x32xf32> to vector<1x16xf32>
    %c7_27 = arith.constant 7 : index
    %c0_28 = arith.constant 0 : index
    %45 = vector.load %arg17[%c7_27, %c0_28] : memref<8x16xf32, #tpu.memory_space<vmem>>, vector<1x16xf32>
    tpu.vector_store %arg17[%c7_27, %c0_28], %44 {strides = array<i32>} : memref<8x16xf32, #tpu.memory_space<vmem>>, vector<1x16xf32>,
    %c1 = arith.constant 1 : index
    %c0_29 = arith.constant 0 : index
    %46 = vector.load %arg14[%c1, %c0_29] : memref<8x128xf32, #tpu.memory_space<vmem>>, vector<1x128xf32>
    %c6 = arith.constant 6 : index
    %c0_30 = arith.constant 0 : index
    %47 = vector.load %arg15[%c6, %c0_30] : memref<8x128xf32, #tpu.memory_space<vmem>>, vector<1x128xf32>
    %48 = arith.addf %46, %47 : vector<1x128xf32>
    %cst_31 = arith.constant dense<0.000000e+00> : vector<1x128xf32>
    %49 = tpu.matmul %41, %7, %cst_31 {dimension_numbers = #tpu.dot_dimension_numbers<[1], [0], [0], [1], [0, 0, 1, 1], [], []>} : vector<1x32xf32>, vector<32x128xf32>, vector<1x128xf32> -> vector<1x128xf32>
    %50 = arith.addf %48, %49 : vector<1x128xf32>
    %51 = arith.addf %50, %8 : vector<1x128xf32>
    %52 = vector.extract_strided_slice %51 {offsets = [0, 0], sizes = [1, 32], strides = [1, 1]} : vector<1x128xf32> to vector<1x32xf32>
    %53 = arith.negf %52 : vector<1x32xf32>
    %54 = math.exp %53 : vector<1x32xf32>
    %cst_32 = arith.constant 1.000000e+00 : f32
    %55 = vector.broadcast %cst_32 : f32 to vector<1x32xf32>
    %56 = arith.addf %55, %54 : vector<1x32xf32>
    %57 = arith.divf %55, %56 : vector<1x32xf32>
    %58 = vector.extract_strided_slice %51 {offsets = [0, 32], sizes = [1, 32], strides = [1, 1]} : vector<1x128xf32> to vector<1x32xf32>
    %59 = arith.negf %58 : vector<1x32xf32>
    %60 = math.exp %59 : vector<1x32xf32>
    %cst_33 = arith.constant 1.000000e+00 : f32
    %61 = vector.broadcast %cst_33 : f32 to vector<1x32xf32>
    %62 = arith.addf %61, %60 : vector<1x32xf32>
    %63 = arith.divf %61, %62 : vector<1x32xf32>
    %64 = vector.extract_strided_slice %51 {offsets = [0, 64], sizes = [1, 32], strides = [1, 1]} : vector<1x128xf32> to vector<1x32xf32>
    %65 = math.tanh %64 : vector<1x32xf32>
    %66 = vector.extract_strided_slice %51 {offsets = [0, 96], sizes = [1, 32], strides = [1, 1]} : vector<1x128xf32> to vector<1x32xf32>
    %67 = arith.negf %66 : vector<1x32xf32>
    %68 = math.exp %67 : vector<1x32xf32>
    %cst_34 = arith.constant 1.000000e+00 : f32
    %69 = vector.broadcast %cst_34 : f32 to vector<1x32xf32>
    %70 = arith.addf %69, %68 : vector<1x32xf32>
    %71 = arith.divf %69, %70 : vector<1x32xf32>
    %72 = arith.mulf %63, %39 : vector<1x32xf32>
    %73 = arith.mulf %57, %65 : vector<1x32xf32>
    %74 = arith.addf %72, %73 : vector<1x32xf32>
    %75 = math.tanh %74 : vector<1x32xf32>
    %76 = arith.mulf %71, %75 : vector<1x32xf32>
    %77 = vector.extract_strided_slice %76 {offsets = [0, 0], sizes = [1, 16], strides = [1, 1]} : vector<1x32xf32> to vector<1x16xf32>
    %c1_35 = arith.constant 1 : index
    %c0_36 = arith.constant 0 : index
    %78 = vector.load %arg16[%c1_35, %c0_36] : memref<8x16xf32, #tpu.memory_space<vmem>>, vector<1x16xf32>
    tpu.vector_store %arg16[%c1_35, %c0_36], %77 {strides = array<i32>} : memref<8x16xf32, #tpu.memory_space<vmem>>, vector<1x16xf32>,
    %79 = vector.extract_strided_slice %76 {offsets = [0, 16], sizes = [1, 16], strides = [1, 1]} : vector<1x32xf32> to vector<1x16xf32>
    %c6_37 = arith.constant 6 : index
    %c0_38 = arith.constant 0 : index
    %80 = vector.load %arg17[%c6_37, %c0_38] : memref<8x16xf32, #tpu.memory_space<vmem>>, vector<1x16xf32>
    tpu.vector_store %arg17[%c6_37, %c0_38], %79 {strides = array<i32>} : memref<8x16xf32, #tpu.memory_space<vmem>>, vector<1x16xf32>,
    %c2 = arith.constant 2 : index
    %c0_39 = arith.constant 0 : index
    %81 = vector.load %arg14[%c2, %c0_39] : memref<8x128xf32, #tpu.memory_space<vmem>>, vector<1x128xf32>
    %c5 = arith.constant 5 : index
    %c0_40 = arith.constant 0 : index
    %82 = vector.load %arg15[%c5, %c0_40] : memref<8x128xf32, #tpu.memory_space<vmem>>, vector<1x128xf32>
    %83 = arith.addf %81, %82 : vector<1x128xf32>
    %cst_41 = arith.constant dense<0.000000e+00> : vector<1x128xf32>
    %84 = tpu.matmul %76, %7, %cst_41 {dimension_numbers = #tpu.dot_dimension_numbers<[1], [0], [0], [1], [0, 0, 1, 1], [], []>} : vector<1x32xf32>, vector<32x128xf32>, vector<1x128xf32> -> vector<1x128xf32>
    %85 = arith.addf %83, %84 : vector<1x128xf32>
    %86 = arith.addf %85, %8 : vector<1x128xf32>
    %87 = vector.extract_strided_slice %86 {offsets = [0, 0], sizes = [1, 32], strides = [1, 1]} : vector<1x128xf32> to vector<1x32xf32>
    %88 = arith.negf %87 : vector<1x32xf32>
    %89 = math.exp %88 : vector<1x32xf32>
    %cst_42 = arith.constant 1.000000e+00 : f32
    %90 = vector.broadcast %cst_42 : f32 to vector<1x32xf32>
    %91 = arith.addf %90, %89 : vector<1x32xf32>
    %92 = arith.divf %90, %91 : vector<1x32xf32>
    %93 = vector.extract_strided_slice %86 {offsets = [0, 32], sizes = [1, 32], strides = [1, 1]} : vector<1x128xf32> to vector<1x32xf32>
    %94 = arith.negf %93 : vector<1x32xf32>
    %95 = math.exp %94 : vector<1x32xf32>
    %cst_43 = arith.constant 1.000000e+00 : f32
    %96 = vector.broadcast %cst_43 : f32 to vector<1x32xf32>
    %97 = arith.addf %96, %95 : vector<1x32xf32>
    %98 = arith.divf %96, %97 : vector<1x32xf32>
    %99 = vector.extract_strided_slice %86 {offsets = [0, 64], sizes = [1, 32], strides = [1, 1]} : vector<1x128xf32> to vector<1x32xf32>
    %100 = math.tanh %99 : vector<1x32xf32>
    %101 = vector.extract_strided_slice %86 {offsets = [0, 96], sizes = [1, 32], strides = [1, 1]} : vector<1x128xf32> to vector<1x32xf32>
    %102 = arith.negf %101 : vector<1x32xf32>
    %103 = math.exp %102 : vector<1x32xf32>
    %cst_44 = arith.constant 1.000000e+00 : f32
    %104 = vector.broadcast %cst_44 : f32 to vector<1x32xf32>
    %105 = arith.addf %104, %103 : vector<1x32xf32>
    %106 = arith.divf %104, %105 : vector<1x32xf32>
    %107 = arith.mulf %98, %74 : vector<1x32xf32>
    %108 = arith.mulf %92, %100 : vector<1x32xf32>
    %109 = arith.addf %107, %108 : vector<1x32xf32>
    %110 = math.tanh %109 : vector<1x32xf32>
    %111 = arith.mulf %106, %110 : vector<1x32xf32>
    %112 = vector.extract_strided_slice %111 {offsets = [0, 0], sizes = [1, 16], strides = [1, 1]} : vector<1x32xf32> to vector<1x16xf32>
    %c2_45 = arith.constant 2 : index
    %c0_46 = arith.constant 0 : index
    %113 = vector.load %arg16[%c2_45, %c0_46] : memref<8x16xf32, #tpu.memory_space<vmem>>, vector<1x16xf32>
    tpu.vector_store %arg16[%c2_45, %c0_46], %112 {strides = array<i32>} : memref<8x16xf32, #tpu.memory_space<vmem>>, vector<1x16xf32>,
    %114 = vector.extract_strided_slice %111 {offsets = [0, 16], sizes = [1, 16], strides = [1, 1]} : vector<1x32xf32> to vector<1x16xf32>
    %c5_47 = arith.constant 5 : index
    %c0_48 = arith.constant 0 : index
    %115 = vector.load %arg17[%c5_47, %c0_48] : memref<8x16xf32, #tpu.memory_space<vmem>>, vector<1x16xf32>
    tpu.vector_store %arg17[%c5_47, %c0_48], %114 {strides = array<i32>} : memref<8x16xf32, #tpu.memory_space<vmem>>, vector<1x16xf32>,
    %c3 = arith.constant 3 : index
    %c0_49 = arith.constant 0 : index
    %116 = vector.load %arg14[%c3, %c0_49] : memref<8x128xf32, #tpu.memory_space<vmem>>, vector<1x128xf32>
    %c4 = arith.constant 4 : index
    %c0_50 = arith.constant 0 : index
    %117 = vector.load %arg15[%c4, %c0_50] : memref<8x128xf32, #tpu.memory_space<vmem>>, vector<1x128xf32>
    %118 = arith.addf %116, %117 : vector<1x128xf32>
    %cst_51 = arith.constant dense<0.000000e+00> : vector<1x128xf32>
    %119 = tpu.matmul %111, %7, %cst_51 {dimension_numbers = #tpu.dot_dimension_numbers<[1], [0], [0], [1], [0, 0, 1, 1], [], []>} : vector<1x32xf32>, vector<32x128xf32>, vector<1x128xf32> -> vector<1x128xf32>
    %120 = arith.addf %118, %119 : vector<1x128xf32>
    %121 = arith.addf %120, %8 : vector<1x128xf32>
    %122 = vector.extract_strided_slice %121 {offsets = [0, 0], sizes = [1, 32], strides = [1, 1]} : vector<1x128xf32> to vector<1x32xf32>
    %123 = arith.negf %122 : vector<1x32xf32>
    %124 = math.exp %123 : vector<1x32xf32>
    %cst_52 = arith.constant 1.000000e+00 : f32
    %125 = vector.broadcast %cst_52 : f32 to vector<1x32xf32>
    %126 = arith.addf %125, %124 : vector<1x32xf32>
    %127 = arith.divf %125, %126 : vector<1x32xf32>
    %128 = vector.extract_strided_slice %121 {offsets = [0, 32], sizes = [1, 32], strides = [1, 1]} : vector<1x128xf32> to vector<1x32xf32>
    %129 = arith.negf %128 : vector<1x32xf32>
    %130 = math.exp %129 : vector<1x32xf32>
    %cst_53 = arith.constant 1.000000e+00 : f32
    %131 = vector.broadcast %cst_53 : f32 to vector<1x32xf32>
    %132 = arith.addf %131, %130 : vector<1x32xf32>
    %133 = arith.divf %131, %132 : vector<1x32xf32>
    %134 = vector.extract_strided_slice %121 {offsets = [0, 64], sizes = [1, 32], strides = [1, 1]} : vector<1x128xf32> to vector<1x32xf32>
    %135 = math.tanh %134 : vector<1x32xf32>
    %136 = vector.extract_strided_slice %121 {offsets = [0, 96], sizes = [1, 32], strides = [1, 1]} : vector<1x128xf32> to vector<1x32xf32>
    %137 = arith.negf %136 : vector<1x32xf32>
    %138 = math.exp %137 : vector<1x32xf32>
    %cst_54 = arith.constant 1.000000e+00 : f32
    %139 = vector.broadcast %cst_54 : f32 to vector<1x32xf32>
    %140 = arith.addf %139, %138 : vector<1x32xf32>
    %141 = arith.divf %139, %140 : vector<1x32xf32>
    %142 = arith.mulf %133, %109 : vector<1x32xf32>
    %143 = arith.mulf %127, %135 : vector<1x32xf32>
    %144 = arith.addf %142, %143 : vector<1x32xf32>
    %145 = math.tanh %144 : vector<1x32xf32>
    %146 = arith.mulf %141, %145 : vector<1x32xf32>
    %147 = vector.extract_strided_slice %146 {offsets = [0, 0], sizes = [1, 16], strides = [1, 1]} : vector<1x32xf32> to vector<1x16xf32>
    %c3_55 = arith.constant 3 : index
    %c0_56 = arith.constant 0 : index
    %148 = vector.load %arg16[%c3_55, %c0_56] : memref<8x16xf32, #tpu.memory_space<vmem>>, vector<1x16xf32>
    tpu.vector_store %arg16[%c3_55, %c0_56], %147 {strides = array<i32>} : memref<8x16xf32, #tpu.memory_space<vmem>>, vector<1x16xf32>,
    %149 = vector.extract_strided_slice %146 {offsets = [0, 16], sizes = [1, 16], strides = [1, 1]} : vector<1x32xf32> to vector<1x16xf32>
    %c4_57 = arith.constant 4 : index
    %c0_58 = arith.constant 0 : index
    %150 = vector.load %arg17[%c4_57, %c0_58] : memref<8x16xf32, #tpu.memory_space<vmem>>, vector<1x16xf32>
    tpu.vector_store %arg17[%c4_57, %c0_58], %149 {strides = array<i32>} : memref<8x16xf32, #tpu.memory_space<vmem>>, vector<1x16xf32>,
    %c4_59 = arith.constant 4 : index
    %c0_60 = arith.constant 0 : index
    %151 = vector.load %arg14[%c4_59, %c0_60] : memref<8x128xf32, #tpu.memory_space<vmem>>, vector<1x128xf32>
    %c3_61 = arith.constant 3 : index
    %c0_62 = arith.constant 0 : index
    %152 = vector.load %arg15[%c3_61, %c0_62] : memref<8x128xf32, #tpu.memory_space<vmem>>, vector<1x128xf32>
    %153 = arith.addf %151, %152 : vector<1x128xf32>
    %cst_63 = arith.constant dense<0.000000e+00> : vector<1x128xf32>
    %154 = tpu.matmul %146, %7, %cst_63 {dimension_numbers = #tpu.dot_dimension_numbers<[1], [0], [0], [1], [0, 0, 1, 1], [], []>} : vector<1x32xf32>, vector<32x128xf32>, vector<1x128xf32> -> vector<1x128xf32>
    %155 = arith.addf %153, %154 : vector<1x128xf32>
    %156 = arith.addf %155, %8 : vector<1x128xf32>
    %157 = vector.extract_strided_slice %156 {offsets = [0, 0], sizes = [1, 32], strides = [1, 1]} : vector<1x128xf32> to vector<1x32xf32>
    %158 = arith.negf %157 : vector<1x32xf32>
    %159 = math.exp %158 : vector<1x32xf32>
    %cst_64 = arith.constant 1.000000e+00 : f32
    %160 = vector.broadcast %cst_64 : f32 to vector<1x32xf32>
    %161 = arith.addf %160, %159 : vector<1x32xf32>
    %162 = arith.divf %160, %161 : vector<1x32xf32>
    %163 = vector.extract_strided_slice %156 {offsets = [0, 32], sizes = [1, 32], strides = [1, 1]} : vector<1x128xf32> to vector<1x32xf32>
    %164 = arith.negf %163 : vector<1x32xf32>
    %165 = math.exp %164 : vector<1x32xf32>
    %cst_65 = arith.constant 1.000000e+00 : f32
    %166 = vector.broadcast %cst_65 : f32 to vector<1x32xf32>
    %167 = arith.addf %166, %165 : vector<1x32xf32>
    %168 = arith.divf %166, %167 : vector<1x32xf32>
    %169 = vector.extract_strided_slice %156 {offsets = [0, 64], sizes = [1, 32], strides = [1, 1]} : vector<1x128xf32> to vector<1x32xf32>
    %170 = math.tanh %169 : vector<1x32xf32>
    %171 = vector.extract_strided_slice %156 {offsets = [0, 96], sizes = [1, 32], strides = [1, 1]} : vector<1x128xf32> to vector<1x32xf32>
    %172 = arith.negf %171 : vector<1x32xf32>
    %173 = math.exp %172 : vector<1x32xf32>
    %cst_66 = arith.constant 1.000000e+00 : f32
    %174 = vector.broadcast %cst_66 : f32 to vector<1x32xf32>
    %175 = arith.addf %174, %173 : vector<1x32xf32>
    %176 = arith.divf %174, %175 : vector<1x32xf32>
    %177 = arith.mulf %168, %144 : vector<1x32xf32>
    %178 = arith.mulf %162, %170 : vector<1x32xf32>
    %179 = arith.addf %177, %178 : vector<1x32xf32>
    %180 = math.tanh %179 : vector<1x32xf32>
    %181 = arith.mulf %176, %180 : vector<1x32xf32>
    %182 = vector.extract_strided_slice %181 {offsets = [0, 0], sizes = [1, 16], strides = [1, 1]} : vector<1x32xf32> to vector<1x16xf32>
    %c4_67 = arith.constant 4 : index
    %c0_68 = arith.constant 0 : index
    %183 = vector.load %arg16[%c4_67, %c0_68] : memref<8x16xf32, #tpu.memory_space<vmem>>, vector<1x16xf32>
    tpu.vector_store %arg16[%c4_67, %c0_68], %182 {strides = array<i32>} : memref<8x16xf32, #tpu.memory_space<vmem>>, vector<1x16xf32>,
    %184 = vector.extract_strided_slice %181 {offsets = [0, 16], sizes = [1, 16], strides = [1, 1]} : vector<1x32xf32> to vector<1x16xf32>
    %c3_69 = arith.constant 3 : index
    %c0_70 = arith.constant 0 : index
    %185 = vector.load %arg17[%c3_69, %c0_70] : memref<8x16xf32, #tpu.memory_space<vmem>>, vector<1x16xf32>
    tpu.vector_store %arg17[%c3_69, %c0_70], %184 {strides = array<i32>} : memref<8x16xf32, #tpu.memory_space<vmem>>, vector<1x16xf32>,
    %c5_71 = arith.constant 5 : index
    %c0_72 = arith.constant 0 : index
    %186 = vector.load %arg14[%c5_71, %c0_72] : memref<8x128xf32, #tpu.memory_space<vmem>>, vector<1x128xf32>
    %c2_73 = arith.constant 2 : index
    %c0_74 = arith.constant 0 : index
    %187 = vector.load %arg15[%c2_73, %c0_74] : memref<8x128xf32, #tpu.memory_space<vmem>>, vector<1x128xf32>
    %188 = arith.addf %186, %187 : vector<1x128xf32>
    %cst_75 = arith.constant dense<0.000000e+00> : vector<1x128xf32>
    %189 = tpu.matmul %181, %7, %cst_75 {dimension_numbers = #tpu.dot_dimension_numbers<[1], [0], [0], [1], [0, 0, 1, 1], [], []>} : vector<1x32xf32>, vector<32x128xf32>, vector<1x128xf32> -> vector<1x128xf32>
    %190 = arith.addf %188, %189 : vector<1x128xf32>
    %191 = arith.addf %190, %8 : vector<1x128xf32>
    %192 = vector.extract_strided_slice %191 {offsets = [0, 0], sizes = [1, 32], strides = [1, 1]} : vector<1x128xf32> to vector<1x32xf32>
    %193 = arith.negf %192 : vector<1x32xf32>
    %194 = math.exp %193 : vector<1x32xf32>
    %cst_76 = arith.constant 1.000000e+00 : f32
    %195 = vector.broadcast %cst_76 : f32 to vector<1x32xf32>
    %196 = arith.addf %195, %194 : vector<1x32xf32>
    %197 = arith.divf %195, %196 : vector<1x32xf32>
    %198 = vector.extract_strided_slice %191 {offsets = [0, 32], sizes = [1, 32], strides = [1, 1]} : vector<1x128xf32> to vector<1x32xf32>
    %199 = arith.negf %198 : vector<1x32xf32>
    %200 = math.exp %199 : vector<1x32xf32>
    %cst_77 = arith.constant 1.000000e+00 : f32
    %201 = vector.broadcast %cst_77 : f32 to vector<1x32xf32>
    %202 = arith.addf %201, %200 : vector<1x32xf32>
    %203 = arith.divf %201, %202 : vector<1x32xf32>
    %204 = vector.extract_strided_slice %191 {offsets = [0, 64], sizes = [1, 32], strides = [1, 1]} : vector<1x128xf32> to vector<1x32xf32>
    %205 = math.tanh %204 : vector<1x32xf32>
    %206 = vector.extract_strided_slice %191 {offsets = [0, 96], sizes = [1, 32], strides = [1, 1]} : vector<1x128xf32> to vector<1x32xf32>
    %207 = arith.negf %206 : vector<1x32xf32>
    %208 = math.exp %207 : vector<1x32xf32>
    %cst_78 = arith.constant 1.000000e+00 : f32
    %209 = vector.broadcast %cst_78 : f32 to vector<1x32xf32>
    %210 = arith.addf %209, %208 : vector<1x32xf32>
    %211 = arith.divf %209, %210 : vector<1x32xf32>
    %212 = arith.mulf %203, %179 : vector<1x32xf32>
    %213 = arith.mulf %197, %205 : vector<1x32xf32>
    %214 = arith.addf %212, %213 : vector<1x32xf32>
    %215 = math.tanh %214 : vector<1x32xf32>
    %216 = arith.mulf %211, %215 : vector<1x32xf32>
    %217 = vector.extract_strided_slice %216 {offsets = [0, 0], sizes = [1, 16], strides = [1, 1]} : vector<1x32xf32> to vector<1x16xf32>
    %c5_79 = arith.constant 5 : index
    %c0_80 = arith.constant 0 : index
    %218 = vector.load %arg16[%c5_79, %c0_80] : memref<8x16xf32, #tpu.memory_space<vmem>>, vector<1x16xf32>
    tpu.vector_store %arg16[%c5_79, %c0_80], %217 {strides = array<i32>} : memref<8x16xf32, #tpu.memory_space<vmem>>, vector<1x16xf32>,
    %219 = vector.extract_strided_slice %216 {offsets = [0, 16], sizes = [1, 16], strides = [1, 1]} : vector<1x32xf32> to vector<1x16xf32>
    %c2_81 = arith.constant 2 : index
    %c0_82 = arith.constant 0 : index
    %220 = vector.load %arg17[%c2_81, %c0_82] : memref<8x16xf32, #tpu.memory_space<vmem>>, vector<1x16xf32>
    tpu.vector_store %arg17[%c2_81, %c0_82], %219 {strides = array<i32>} : memref<8x16xf32, #tpu.memory_space<vmem>>, vector<1x16xf32>,
    %c6_83 = arith.constant 6 : index
    %c0_84 = arith.constant 0 : index
    %221 = vector.load %arg14[%c6_83, %c0_84] : memref<8x128xf32, #tpu.memory_space<vmem>>, vector<1x128xf32>
    %c1_85 = arith.constant 1 : index
    %c0_86 = arith.constant 0 : index
    %222 = vector.load %arg15[%c1_85, %c0_86] : memref<8x128xf32, #tpu.memory_space<vmem>>, vector<1x128xf32>
    %223 = arith.addf %221, %222 : vector<1x128xf32>
    %cst_87 = arith.constant dense<0.000000e+00> : vector<1x128xf32>
    %224 = tpu.matmul %216, %7, %cst_87 {dimension_numbers = #tpu.dot_dimension_numbers<[1], [0], [0], [1], [0, 0, 1, 1], [], []>} : vector<1x32xf32>, vector<32x128xf32>, vector<1x128xf32> -> vector<1x128xf32>
    %225 = arith.addf %223, %224 : vector<1x128xf32>
    %226 = arith.addf %225, %8 : vector<1x128xf32>
    %227 = vector.extract_strided_slice %226 {offsets = [0, 0], sizes = [1, 32], strides = [1, 1]} : vector<1x128xf32> to vector<1x32xf32>
    %228 = arith.negf %227 : vector<1x32xf32>
    %229 = math.exp %228 : vector<1x32xf32>
    %cst_88 = arith.constant 1.000000e+00 : f32
    %230 = vector.broadcast %cst_88 : f32 to vector<1x32xf32>
    %231 = arith.addf %230, %229 : vector<1x32xf32>
    %232 = arith.divf %230, %231 : vector<1x32xf32>
    %233 = vector.extract_strided_slice %226 {offsets = [0, 32], sizes = [1, 32], strides = [1, 1]} : vector<1x128xf32> to vector<1x32xf32>
    %234 = arith.negf %233 : vector<1x32xf32>
    %235 = math.exp %234 : vector<1x32xf32>
    %cst_89 = arith.constant 1.000000e+00 : f32
    %236 = vector.broadcast %cst_89 : f32 to vector<1x32xf32>
    %237 = arith.addf %236, %235 : vector<1x32xf32>
    %238 = arith.divf %236, %237 : vector<1x32xf32>
    %239 = vector.extract_strided_slice %226 {offsets = [0, 64], sizes = [1, 32], strides = [1, 1]} : vector<1x128xf32> to vector<1x32xf32>
    %240 = math.tanh %239 : vector<1x32xf32>
    %241 = vector.extract_strided_slice %226 {offsets = [0, 96], sizes = [1, 32], strides = [1, 1]} : vector<1x128xf32> to vector<1x32xf32>
    %242 = arith.negf %241 : vector<1x32xf32>
    %243 = math.exp %242 : vector<1x32xf32>
    %cst_90 = arith.constant 1.000000e+00 : f32
    %244 = vector.broadcast %cst_90 : f32 to vector<1x32xf32>
    %245 = arith.addf %244, %243 : vector<1x32xf32>
    %246 = arith.divf %244, %245 : vector<1x32xf32>
    %247 = arith.mulf %238, %214 : vector<1x32xf32>
    %248 = arith.mulf %232, %240 : vector<1x32xf32>
    %249 = arith.addf %247, %248 : vector<1x32xf32>
    %250 = math.tanh %249 : vector<1x32xf32>
    %251 = arith.mulf %246, %250 : vector<1x32xf32>
    %252 = vector.extract_strided_slice %251 {offsets = [0, 0], sizes = [1, 16], strides = [1, 1]} : vector<1x32xf32> to vector<1x16xf32>
    %c6_91 = arith.constant 6 : index
    %c0_92 = arith.constant 0 : index
    %253 = vector.load %arg16[%c6_91, %c0_92] : memref<8x16xf32, #tpu.memory_space<vmem>>, vector<1x16xf32>
    tpu.vector_store %arg16[%c6_91, %c0_92], %252 {strides = array<i32>} : memref<8x16xf32, #tpu.memory_space<vmem>>, vector<1x16xf32>,
    %254 = vector.extract_strided_slice %251 {offsets = [0, 16], sizes = [1, 16], strides = [1, 1]} : vector<1x32xf32> to vector<1x16xf32>
    %c1_93 = arith.constant 1 : index
    %c0_94 = arith.constant 0 : index
    %255 = vector.load %arg17[%c1_93, %c0_94] : memref<8x16xf32, #tpu.memory_space<vmem>>, vector<1x16xf32>
    tpu.vector_store %arg17[%c1_93, %c0_94], %254 {strides = array<i32>} : memref<8x16xf32, #tpu.memory_space<vmem>>, vector<1x16xf32>,
    %c7_95 = arith.constant 7 : index
    %c0_96 = arith.constant 0 : index
    %256 = vector.load %arg14[%c7_95, %c0_96] : memref<8x128xf32, #tpu.memory_space<vmem>>, vector<1x128xf32>
    %c0_97 = arith.constant 0 : index
    %c0_98 = arith.constant 0 : index
    %257 = vector.load %arg15[%c0_97, %c0_98] : memref<8x128xf32, #tpu.memory_space<vmem>>, vector<1x128xf32>
    %258 = arith.addf %256, %257 : vector<1x128xf32>
    %cst_99 = arith.constant dense<0.000000e+00> : vector<1x128xf32>
    %259 = tpu.matmul %251, %7, %cst_99 {dimension_numbers = #tpu.dot_dimension_numbers<[1], [0], [0], [1], [0, 0, 1, 1], [], []>} : vector<1x32xf32>, vector<32x128xf32>, vector<1x128xf32> -> vector<1x128xf32>
    %260 = arith.addf %258, %259 : vector<1x128xf32>
    %261 = arith.addf %260, %8 : vector<1x128xf32>
    %262 = vector.extract_strided_slice %261 {offsets = [0, 0], sizes = [1, 32], strides = [1, 1]} : vector<1x128xf32> to vector<1x32xf32>
    %263 = arith.negf %262 : vector<1x32xf32>
    %264 = math.exp %263 : vector<1x32xf32>
    %cst_100 = arith.constant 1.000000e+00 : f32
    %265 = vector.broadcast %cst_100 : f32 to vector<1x32xf32>
    %266 = arith.addf %265, %264 : vector<1x32xf32>
    %267 = arith.divf %265, %266 : vector<1x32xf32>
    %268 = vector.extract_strided_slice %261 {offsets = [0, 32], sizes = [1, 32], strides = [1, 1]} : vector<1x128xf32> to vector<1x32xf32>
    %269 = arith.negf %268 : vector<1x32xf32>
    %270 = math.exp %269 : vector<1x32xf32>
    %cst_101 = arith.constant 1.000000e+00 : f32
    %271 = vector.broadcast %cst_101 : f32 to vector<1x32xf32>
    %272 = arith.addf %271, %270 : vector<1x32xf32>
    %273 = arith.divf %271, %272 : vector<1x32xf32>
    %274 = vector.extract_strided_slice %261 {offsets = [0, 64], sizes = [1, 32], strides = [1, 1]} : vector<1x128xf32> to vector<1x32xf32>
    %275 = math.tanh %274 : vector<1x32xf32>
    %276 = vector.extract_strided_slice %261 {offsets = [0, 96], sizes = [1, 32], strides = [1, 1]} : vector<1x128xf32> to vector<1x32xf32>
    %277 = arith.negf %276 : vector<1x32xf32>
    %278 = math.exp %277 : vector<1x32xf32>
    %cst_102 = arith.constant 1.000000e+00 : f32
    %279 = vector.broadcast %cst_102 : f32 to vector<1x32xf32>
    %280 = arith.addf %279, %278 : vector<1x32xf32>
    %281 = arith.divf %279, %280 : vector<1x32xf32>
    %282 = arith.mulf %273, %249 : vector<1x32xf32>
    %283 = arith.mulf %267, %275 : vector<1x32xf32>
    %284 = arith.addf %282, %283 : vector<1x32xf32>
    %285 = math.tanh %284 : vector<1x32xf32>
    %286 = arith.mulf %281, %285 : vector<1x32xf32>
    %287 = vector.extract_strided_slice %286 {offsets = [0, 0], sizes = [1, 16], strides = [1, 1]} : vector<1x32xf32> to vector<1x16xf32>
    %c7_103 = arith.constant 7 : index
    %c0_104 = arith.constant 0 : index
    %288 = vector.load %arg16[%c7_103, %c0_104] : memref<8x16xf32, #tpu.memory_space<vmem>>, vector<1x16xf32>
    tpu.vector_store %arg16[%c7_103, %c0_104], %287 {strides = array<i32>} : memref<8x16xf32, #tpu.memory_space<vmem>>, vector<1x16xf32>,
    %289 = vector.extract_strided_slice %286 {offsets = [0, 16], sizes = [1, 16], strides = [1, 1]} : vector<1x32xf32> to vector<1x16xf32>
    %c0_105 = arith.constant 0 : index
    %c0_106 = arith.constant 0 : index
    %290 = vector.load %arg17[%c0_105, %c0_106] : memref<8x16xf32, #tpu.memory_space<vmem>>, vector<1x16xf32>
    tpu.vector_store %arg17[%c0_105, %c0_106], %289 {strides = array<i32>} : memref<8x16xf32, #tpu.memory_space<vmem>>, vector<1x16xf32>,
    %c0_107 = arith.constant 0 : index
    %c0_108 = arith.constant 0 : index
    %291 = vector.load %arg16[%c0_107, %c0_108] : memref<8x16xf32, #tpu.memory_space<vmem>>, vector<8x16xf32>
    %c0_109 = arith.constant 0 : index
    %c0_110 = arith.constant 0 : index
    %292 = vector.load %arg7[%c0_109, %c0_110] : memref<16x128xf32, #tpu.memory_space<vmem>>, vector<16x128xf32>
    %cst_111 = arith.constant dense<0.000000e+00> : vector<8x128xf32>
    %293 = tpu.matmul %291, %292, %cst_111 {dimension_numbers = #tpu.dot_dimension_numbers<[1], [0], [0], [1], [0, 0, 1, 1], [], []>} : vector<8x16xf32>, vector<16x128xf32>, vector<8x128xf32> -> vector<8x128xf32>
    %c0_112 = arith.constant 0 : index
    %c0_113 = arith.constant 0 : index
    %294 = vector.load %arg17[%c0_112, %c0_113] : memref<8x16xf32, #tpu.memory_space<vmem>>, vector<8x16xf32>
    %c0_114 = arith.constant 0 : index
    %c0_115 = arith.constant 0 : index
    %295 = vector.load %arg8[%c0_114, %c0_115] : memref<16x128xf32, #tpu.memory_space<vmem>>, vector<16x128xf32>
    %cst_116 = arith.constant dense<0.000000e+00> : vector<8x128xf32>
    %296 = tpu.matmul %294, %295, %cst_116 {dimension_numbers = #tpu.dot_dimension_numbers<[1], [0], [0], [1], [0, 0, 1, 1], [], []>} : vector<8x16xf32>, vector<16x128xf32>, vector<8x128xf32> -> vector<8x128xf32>
    %297 = arith.addf %293, %296 : vector<8x128xf32>
    %c0_117 = arith.constant 0 : index
    %c0_118 = arith.constant 0 : index
    %298 = vector.load %arg9[%c0_117, %c0_118] : memref<1x128xf32, #tpu.memory_space<vmem>>, vector<1x128xf32>
    %299 = vector.broadcast %298 : vector<1x128xf32> to vector<8x128xf32>
    %300 = arith.addf %297, %299 : vector<8x128xf32>
    %c0_119 = arith.constant 0 : index
    %c0_120 = arith.constant 0 : index
    %301 = vector.load %arg18[%c0_119, %c0_120] : memref<8x128xf32, #tpu.memory_space<vmem>>, vector<8x128xf32>
    tpu.vector_store %arg18[%c0_119, %c0_120], %300 {strides = array<i32>} : memref<8x128xf32, #tpu.memory_space<vmem>>, vector<8x128xf32>,
    %c0_121 = arith.constant 0 : index
    %c0_122 = arith.constant 0 : index
    %302 = vector.load %arg10[%c0_121, %c0_122] : memref<5x128xf32, #tpu.memory_space<vmem>>, vector<5x128xf32>
    %303 = tpu.iota {dimensions = array<i32: 0>} : vector<5x128xi32>
    %304 = tpu.iota {dimensions = array<i32: 0>} : vector<5x128xi32>
    %305 = tpu.iota {dimensions = array<i32: 1>} : vector<5x128xi32>
    %306 = arith.cmpi eq, %304, %305 : vector<5x128xi32>
    %307 = tpu.iota {dimensions = array<i32: 1>} : vector<1x128xi32>
    %308 = tpu.iota {dimensions = array<i32: 0>} : vector<5x1xi32>
    %c0_i32 = arith.constant 0 : i32
    %309 = vector.broadcast %c0_i32 : i32 to vector<1x128xi32>
    %c3_i32 = arith.constant 3 : i32
    %310 = vector.broadcast %c3_i32 : i32 to vector<5x1xi32>
    %311 = arith.cmpi eq, %308, %310 : vector<5x1xi32>
    %cst_123 = arith.constant 0.000000e+00 : f32
    %cst_124 = arith.constant -1.000000e+04 : f32
    %312 = vector.broadcast %cst_123 : f32 to vector<5x1xf32>
    %313 = vector.broadcast %cst_124 : f32 to vector<5x1xf32>
    %314 = arith.select %311, %312, %313 : vector<5x1xi1>, vector<5x1xf32>
    %315 = vector.broadcast %314 : vector<5x1xf32> to vector<5x128xf32>
    %316 = arith.addf %302, %315 : vector<5x128xf32>
    %cst_125 = arith.constant dense<0xFF800000> : vector<128xf32>
    %317 = vector.multi_reduction <maximumf>, %316, %cst_125 [0] : vector<5x128xf32> to vector<128xf32>
    %318 = vector.shape_cast %317 : vector<128xf32> to vector<1x128xf32>
    %319 = vector.broadcast %318 : vector<1x128xf32> to vector<5x128xf32>
    %320 = arith.cmpf oeq, %316, %319 : vector<5x128xf32>
    %c5_i32 = arith.constant 5 : i32
    %321 = vector.broadcast %c5_i32 : i32 to vector<5x128xi32>
    %322 = arith.select %320, %303, %321 : vector<5x128xi1>, vector<5x128xi32>
    %cst_126 = arith.constant dense<2147483647> : vector<128xi32>
    %323 = vector.multi_reduction <minsi>, %322, %cst_126 [0] : vector<5x128xi32> to vector<128xi32>
    %324 = vector.shape_cast %323 : vector<128xi32> to vector<1x128xi32>
    %c0_127 = arith.constant 0 : index
    %c0_128 = arith.constant 0 : index
    %325 = vector.load %arg19[%c0_127, %c0_128] : memref<8x128xi32, #tpu.memory_space<vmem>>, vector<1x128xi32>
    tpu.vector_store %arg19[%c0_127, %c0_128], %324 {strides = array<i32>} : memref<8x128xi32, #tpu.memory_space<vmem>>, vector<1x128xi32>,
    %c0_129 = arith.constant 0 : index
    %c0_130 = arith.constant 0 : index
    %326 = vector.load %arg18[%c0_129, %c0_130] : memref<8x128xf32, #tpu.memory_space<vmem>>, vector<1x128xf32>
    %327 = arith.addf %318, %326 : vector<1x128xf32>
    %cst_131 = arith.constant 0.000000e+00 : f32
    %328 = vector.shape_cast %327 : vector<1x128xf32> to vector<1x128xf32>
    %329 = vector.broadcast %328 : vector<1x128xf32> to vector<5x128xf32>
    %330 = vector.broadcast %cst_131 : f32 to vector<5x128xf32>
    %331 = arith.select %306, %329, %330 : vector<5x128xi1>, vector<5x128xf32>
    %cst_132 = arith.constant dense<0.000000e+00> : vector<5xf32>
    %332 = vector.multi_reduction <add>, %331, %cst_132 [1] : vector<5x128xf32> to vector<5xf32>
    %333 = vector.shape_cast %332 : vector<5xf32> to vector<5x1xf32>
    %334 = vector.broadcast %333 : vector<5x1xf32> to vector<5x128xf32>
    %335 = arith.addf %302, %334 : vector<5x128xf32>
    %cst_133 = arith.constant dense<0xFF800000> : vector<128xf32>
    %336 = vector.multi_reduction <maximumf>, %335, %cst_133 [0] : vector<5x128xf32> to vector<128xf32>
    %337 = vector.shape_cast %336 : vector<128xf32> to vector<1x128xf32>
    %338 = vector.broadcast %337 : vector<1x128xf32> to vector<5x128xf32>
    %339 = arith.cmpf oeq, %335, %338 : vector<5x128xf32>
    %c5_i32_134 = arith.constant 5 : i32
    %340 = vector.broadcast %c5_i32_134 : i32 to vector<5x128xi32>
    %341 = arith.select %339, %303, %340 : vector<5x128xi1>, vector<5x128xi32>
    %cst_135 = arith.constant dense<2147483647> : vector<128xi32>
    %342 = vector.multi_reduction <minsi>, %341, %cst_135 [0] : vector<5x128xi32> to vector<128xi32>
    %343 = vector.shape_cast %342 : vector<128xi32> to vector<1x128xi32>
    %c1_136 = arith.constant 1 : index
    %c0_137 = arith.constant 0 : index
    %344 = vector.load %arg19[%c1_136, %c0_137] : memref<8x128xi32, #tpu.memory_space<vmem>>, vector<1x128xi32>
    tpu.vector_store %arg19[%c1_136, %c0_137], %343 {strides = array<i32>} : memref<8x128xi32, #tpu.memory_space<vmem>>, vector<1x128xi32>,
    %c1_138 = arith.constant 1 : index
    %c0_139 = arith.constant 0 : index
    %345 = vector.load %arg18[%c1_138, %c0_139] : memref<8x128xf32, #tpu.memory_space<vmem>>, vector<1x128xf32>
    %346 = arith.addf %337, %345 : vector<1x128xf32>
    %cst_140 = arith.constant 0.000000e+00 : f32
    %347 = vector.shape_cast %346 : vector<1x128xf32> to vector<1x128xf32>
    %348 = vector.broadcast %347 : vector<1x128xf32> to vector<5x128xf32>
    %349 = vector.broadcast %cst_140 : f32 to vector<5x128xf32>
    %350 = arith.select %306, %348, %349 : vector<5x128xi1>, vector<5x128xf32>
    %cst_141 = arith.constant dense<0.000000e+00> : vector<5xf32>
    %351 = vector.multi_reduction <add>, %350, %cst_141 [1] : vector<5x128xf32> to vector<5xf32>
    %352 = vector.shape_cast %351 : vector<5xf32> to vector<5x1xf32>
    %353 = vector.broadcast %352 : vector<5x1xf32> to vector<5x128xf32>
    %354 = arith.addf %302, %353 : vector<5x128xf32>
    %cst_142 = arith.constant dense<0xFF800000> : vector<128xf32>
    %355 = vector.multi_reduction <maximumf>, %354, %cst_142 [0] : vector<5x128xf32> to vector<128xf32>
    %356 = vector.shape_cast %355 : vector<128xf32> to vector<1x128xf32>
    %357 = vector.broadcast %356 : vector<1x128xf32> to vector<5x128xf32>
    %358 = arith.cmpf oeq, %354, %357 : vector<5x128xf32>
    %c5_i32_143 = arith.constant 5 : i32
    %359 = vector.broadcast %c5_i32_143 : i32 to vector<5x128xi32>
    %360 = arith.select %358, %303, %359 : vector<5x128xi1>, vector<5x128xi32>
    %cst_144 = arith.constant dense<2147483647> : vector<128xi32>
    %361 = vector.multi_reduction <minsi>, %360, %cst_144 [0] : vector<5x128xi32> to vector<128xi32>
    %362 = vector.shape_cast %361 : vector<128xi32> to vector<1x128xi32>
    %c2_145 = arith.constant 2 : index
    %c0_146 = arith.constant 0 : index
    %363 = vector.load %arg19[%c2_145, %c0_146] : memref<8x128xi32, #tpu.memory_space<vmem>>, vector<1x128xi32>
    tpu.vector_store %arg19[%c2_145, %c0_146], %362 {strides = array<i32>} : memref<8x128xi32, #tpu.memory_space<vmem>>, vector<1x128xi32>,
    %c2_147 = arith.constant 2 : index
    %c0_148 = arith.constant 0 : index
    %364 = vector.load %arg18[%c2_147, %c0_148] : memref<8x128xf32, #tpu.memory_space<vmem>>, vector<1x128xf32>
    %365 = arith.addf %356, %364 : vector<1x128xf32>
    %cst_149 = arith.constant 0.000000e+00 : f32
    %366 = vector.shape_cast %365 : vector<1x128xf32> to vector<1x128xf32>
    %367 = vector.broadcast %366 : vector<1x128xf32> to vector<5x128xf32>
    %368 = vector.broadcast %cst_149 : f32 to vector<5x128xf32>
    %369 = arith.select %306, %367, %368 : vector<5x128xi1>, vector<5x128xf32>
    %cst_150 = arith.constant dense<0.000000e+00> : vector<5xf32>
    %370 = vector.multi_reduction <add>, %369, %cst_150 [1] : vector<5x128xf32> to vector<5xf32>
    %371 = vector.shape_cast %370 : vector<5xf32> to vector<5x1xf32>
    %372 = vector.broadcast %371 : vector<5x1xf32> to vector<5x128xf32>
    %373 = arith.addf %302, %372 : vector<5x128xf32>
    %cst_151 = arith.constant dense<0xFF800000> : vector<128xf32>
    %374 = vector.multi_reduction <maximumf>, %373, %cst_151 [0] : vector<5x128xf32> to vector<128xf32>
    %375 = vector.shape_cast %374 : vector<128xf32> to vector<1x128xf32>
    %376 = vector.broadcast %375 : vector<1x128xf32> to vector<5x128xf32>
    %377 = arith.cmpf oeq, %373, %376 : vector<5x128xf32>
    %c5_i32_152 = arith.constant 5 : i32
    %378 = vector.broadcast %c5_i32_152 : i32 to vector<5x128xi32>
    %379 = arith.select %377, %303, %378 : vector<5x128xi1>, vector<5x128xi32>
    %cst_153 = arith.constant dense<2147483647> : vector<128xi32>
    %380 = vector.multi_reduction <minsi>, %379, %cst_153 [0] : vector<5x128xi32> to vector<128xi32>
    %381 = vector.shape_cast %380 : vector<128xi32> to vector<1x128xi32>
    %c3_154 = arith.constant 3 : index
    %c0_155 = arith.constant 0 : index
    %382 = vector.load %arg19[%c3_154, %c0_155] : memref<8x128xi32, #tpu.memory_space<vmem>>, vector<1x128xi32>
    tpu.vector_store %arg19[%c3_154, %c0_155], %381 {strides = array<i32>} : memref<8x128xi32, #tpu.memory_space<vmem>>, vector<1x128xi32>,
    %c3_156 = arith.constant 3 : index
    %c0_157 = arith.constant 0 : index
    %383 = vector.load %arg18[%c3_156, %c0_157] : memref<8x128xf32, #tpu.memory_space<vmem>>, vector<1x128xf32>
    %384 = arith.addf %375, %383 : vector<1x128xf32>
    %cst_158 = arith.constant 0.000000e+00 : f32
    %385 = vector.shape_cast %384 : vector<1x128xf32> to vector<1x128xf32>
    %386 = vector.broadcast %385 : vector<1x128xf32> to vector<5x128xf32>
    %387 = vector.broadcast %cst_158 : f32 to vector<5x128xf32>
    %388 = arith.select %306, %386, %387 : vector<5x128xi1>, vector<5x128xf32>
    %cst_159 = arith.constant dense<0.000000e+00> : vector<5xf32>
    %389 = vector.multi_reduction <add>, %388, %cst_159 [1] : vector<5x128xf32> to vector<5xf32>
    %390 = vector.shape_cast %389 : vector<5xf32> to vector<5x1xf32>
    %391 = vector.broadcast %390 : vector<5x1xf32> to vector<5x128xf32>
    %392 = arith.addf %302, %391 : vector<5x128xf32>
    %cst_160 = arith.constant dense<0xFF800000> : vector<128xf32>
    %393 = vector.multi_reduction <maximumf>, %392, %cst_160 [0] : vector<5x128xf32> to vector<128xf32>
    %394 = vector.shape_cast %393 : vector<128xf32> to vector<1x128xf32>
    %395 = vector.broadcast %394 : vector<1x128xf32> to vector<5x128xf32>
    %396 = arith.cmpf oeq, %392, %395 : vector<5x128xf32>
    %c5_i32_161 = arith.constant 5 : i32
    %397 = vector.broadcast %c5_i32_161 : i32 to vector<5x128xi32>
    %398 = arith.select %396, %303, %397 : vector<5x128xi1>, vector<5x128xi32>
    %cst_162 = arith.constant dense<2147483647> : vector<128xi32>
    %399 = vector.multi_reduction <minsi>, %398, %cst_162 [0] : vector<5x128xi32> to vector<128xi32>
    %400 = vector.shape_cast %399 : vector<128xi32> to vector<1x128xi32>
    %c4_163 = arith.constant 4 : index
    %c0_164 = arith.constant 0 : index
    %401 = vector.load %arg19[%c4_163, %c0_164] : memref<8x128xi32, #tpu.memory_space<vmem>>, vector<1x128xi32>
    tpu.vector_store %arg19[%c4_163, %c0_164], %400 {strides = array<i32>} : memref<8x128xi32, #tpu.memory_space<vmem>>, vector<1x128xi32>,
    %c4_165 = arith.constant 4 : index
    %c0_166 = arith.constant 0 : index
    %402 = vector.load %arg18[%c4_165, %c0_166] : memref<8x128xf32, #tpu.memory_space<vmem>>, vector<1x128xf32>
    %403 = arith.addf %394, %402 : vector<1x128xf32>
    %cst_167 = arith.constant 0.000000e+00 : f32
    %404 = vector.shape_cast %403 : vector<1x128xf32> to vector<1x128xf32>
    %405 = vector.broadcast %404 : vector<1x128xf32> to vector<5x128xf32>
    %406 = vector.broadcast %cst_167 : f32 to vector<5x128xf32>
    %407 = arith.select %306, %405, %406 : vector<5x128xi1>, vector<5x128xf32>
    %cst_168 = arith.constant dense<0.000000e+00> : vector<5xf32>
    %408 = vector.multi_reduction <add>, %407, %cst_168 [1] : vector<5x128xf32> to vector<5xf32>
    %409 = vector.shape_cast %408 : vector<5xf32> to vector<5x1xf32>
    %410 = vector.broadcast %409 : vector<5x1xf32> to vector<5x128xf32>
    %411 = arith.addf %302, %410 : vector<5x128xf32>
    %cst_169 = arith.constant dense<0xFF800000> : vector<128xf32>
    %412 = vector.multi_reduction <maximumf>, %411, %cst_169 [0] : vector<5x128xf32> to vector<128xf32>
    %413 = vector.shape_cast %412 : vector<128xf32> to vector<1x128xf32>
    %414 = vector.broadcast %413 : vector<1x128xf32> to vector<5x128xf32>
    %415 = arith.cmpf oeq, %411, %414 : vector<5x128xf32>
    %c5_i32_170 = arith.constant 5 : i32
    %416 = vector.broadcast %c5_i32_170 : i32 to vector<5x128xi32>
    %417 = arith.select %415, %303, %416 : vector<5x128xi1>, vector<5x128xi32>
    %cst_171 = arith.constant dense<2147483647> : vector<128xi32>
    %418 = vector.multi_reduction <minsi>, %417, %cst_171 [0] : vector<5x128xi32> to vector<128xi32>
    %419 = vector.shape_cast %418 : vector<128xi32> to vector<1x128xi32>
    %c5_172 = arith.constant 5 : index
    %c0_173 = arith.constant 0 : index
    %420 = vector.load %arg19[%c5_172, %c0_173] : memref<8x128xi32, #tpu.memory_space<vmem>>, vector<1x128xi32>
    tpu.vector_store %arg19[%c5_172, %c0_173], %419 {strides = array<i32>} : memref<8x128xi32, #tpu.memory_space<vmem>>, vector<1x128xi32>,
    %c5_174 = arith.constant 5 : index
    %c0_175 = arith.constant 0 : index
    %421 = vector.load %arg18[%c5_174, %c0_175] : memref<8x128xf32, #tpu.memory_space<vmem>>, vector<1x128xf32>
    %422 = arith.addf %413, %421 : vector<1x128xf32>
    %cst_176 = arith.constant 0.000000e+00 : f32
    %423 = vector.shape_cast %422 : vector<1x128xf32> to vector<1x128xf32>
    %424 = vector.broadcast %423 : vector<1x128xf32> to vector<5x128xf32>
    %425 = vector.broadcast %cst_176 : f32 to vector<5x128xf32>
    %426 = arith.select %306, %424, %425 : vector<5x128xi1>, vector<5x128xf32>
    %cst_177 = arith.constant dense<0.000000e+00> : vector<5xf32>
    %427 = vector.multi_reduction <add>, %426, %cst_177 [1] : vector<5x128xf32> to vector<5xf32>
    %428 = vector.shape_cast %427 : vector<5xf32> to vector<5x1xf32>
    %429 = vector.broadcast %428 : vector<5x1xf32> to vector<5x128xf32>
    %430 = arith.addf %302, %429 : vector<5x128xf32>
    %cst_178 = arith.constant dense<0xFF800000> : vector<128xf32>
    %431 = vector.multi_reduction <maximumf>, %430, %cst_178 [0] : vector<5x128xf32> to vector<128xf32>
    %432 = vector.shape_cast %431 : vector<128xf32> to vector<1x128xf32>
    %433 = vector.broadcast %432 : vector<1x128xf32> to vector<5x128xf32>
    %434 = arith.cmpf oeq, %430, %433 : vector<5x128xf32>
    %c5_i32_179 = arith.constant 5 : i32
    %435 = vector.broadcast %c5_i32_179 : i32 to vector<5x128xi32>
    %436 = arith.select %434, %303, %435 : vector<5x128xi1>, vector<5x128xi32>
    %cst_180 = arith.constant dense<2147483647> : vector<128xi32>
    %437 = vector.multi_reduction <minsi>, %436, %cst_180 [0] : vector<5x128xi32> to vector<128xi32>
    %438 = vector.shape_cast %437 : vector<128xi32> to vector<1x128xi32>
    %c6_181 = arith.constant 6 : index
    %c0_182 = arith.constant 0 : index
    %439 = vector.load %arg19[%c6_181, %c0_182] : memref<8x128xi32, #tpu.memory_space<vmem>>, vector<1x128xi32>
    tpu.vector_store %arg19[%c6_181, %c0_182], %438 {strides = array<i32>} : memref<8x128xi32, #tpu.memory_space<vmem>>, vector<1x128xi32>,
    %c6_183 = arith.constant 6 : index
    %c0_184 = arith.constant 0 : index
    %440 = vector.load %arg18[%c6_183, %c0_184] : memref<8x128xf32, #tpu.memory_space<vmem>>, vector<1x128xf32>
    %441 = arith.addf %432, %440 : vector<1x128xf32>
    %cst_185 = arith.constant 0.000000e+00 : f32
    %442 = vector.shape_cast %441 : vector<1x128xf32> to vector<1x128xf32>
    %443 = vector.broadcast %442 : vector<1x128xf32> to vector<5x128xf32>
    %444 = vector.broadcast %cst_185 : f32 to vector<5x128xf32>
    %445 = arith.select %306, %443, %444 : vector<5x128xi1>, vector<5x128xf32>
    %cst_186 = arith.constant dense<0.000000e+00> : vector<5xf32>
    %446 = vector.multi_reduction <add>, %445, %cst_186 [1] : vector<5x128xf32> to vector<5xf32>
    %447 = vector.shape_cast %446 : vector<5xf32> to vector<5x1xf32>
    %448 = vector.broadcast %447 : vector<5x1xf32> to vector<5x128xf32>
    %449 = arith.addf %302, %448 : vector<5x128xf32>
    %cst_187 = arith.constant dense<0xFF800000> : vector<128xf32>
    %450 = vector.multi_reduction <maximumf>, %449, %cst_187 [0] : vector<5x128xf32> to vector<128xf32>
    %451 = vector.shape_cast %450 : vector<128xf32> to vector<1x128xf32>
    %452 = vector.broadcast %451 : vector<1x128xf32> to vector<5x128xf32>
    %453 = arith.cmpf oeq, %449, %452 : vector<5x128xf32>
    %c5_i32_188 = arith.constant 5 : i32
    %454 = vector.broadcast %c5_i32_188 : i32 to vector<5x128xi32>
    %455 = arith.select %453, %303, %454 : vector<5x128xi1>, vector<5x128xi32>
    %cst_189 = arith.constant dense<2147483647> : vector<128xi32>
    %456 = vector.multi_reduction <minsi>, %455, %cst_189 [0] : vector<5x128xi32> to vector<128xi32>
    %457 = vector.shape_cast %456 : vector<128xi32> to vector<1x128xi32>
    %c7_190 = arith.constant 7 : index
    %c0_191 = arith.constant 0 : index
    %458 = vector.load %arg19[%c7_190, %c0_191] : memref<8x128xi32, #tpu.memory_space<vmem>>, vector<1x128xi32>
    tpu.vector_store %arg19[%c7_190, %c0_191], %457 {strides = array<i32>} : memref<8x128xi32, #tpu.memory_space<vmem>>, vector<1x128xi32>,
    %c7_192 = arith.constant 7 : index
    %c0_193 = arith.constant 0 : index
    %459 = vector.load %arg18[%c7_192, %c0_193] : memref<8x128xf32, #tpu.memory_space<vmem>>, vector<1x128xf32>
    %460 = arith.addf %451, %459 : vector<1x128xf32>
    %cst_194 = arith.constant 0.000000e+00 : f32
    %461 = vector.shape_cast %460 : vector<1x128xf32> to vector<1x128xf32>
    %462 = vector.broadcast %461 : vector<1x128xf32> to vector<5x128xf32>
    %463 = vector.broadcast %cst_194 : f32 to vector<5x128xf32>
    %464 = arith.select %306, %462, %463 : vector<5x128xi1>, vector<5x128xf32>
    %cst_195 = arith.constant dense<0.000000e+00> : vector<5xf32>
    %465 = vector.multi_reduction <add>, %464, %cst_195 [1] : vector<5x128xf32> to vector<5xf32>
    %466 = vector.shape_cast %465 : vector<5xf32> to vector<5x1xf32>
    %467 = vector.extract_strided_slice %302 {offsets = [0, 4], sizes = [5, 1], strides = [1, 1]} : vector<5x128xf32> to vector<5x1xf32>
    %468 = arith.addf %466, %467 : vector<5x1xf32>
    %cst_196 = arith.constant dense<0xFF800000> : vector<1xf32>
    %469 = vector.multi_reduction <maximumf>, %468, %cst_196 [0] : vector<5x1xf32> to vector<1xf32>
    %470 = vector.shape_cast %469 : vector<1xf32> to vector<1x1xf32>
    %471 = vector.broadcast %470 : vector<1x1xf32> to vector<5x1xf32>
    %472 = arith.cmpf oeq, %468, %471 : vector<5x1xf32>
    %c5_i32_197 = arith.constant 5 : i32
    %473 = vector.broadcast %c5_i32_197 : i32 to vector<5x1xi32>
    %474 = arith.select %472, %308, %473 : vector<5x1xi1>, vector<5x1xi32>
    %cst_198 = arith.constant dense<2147483647> : vector<1xi32>
    %475 = vector.multi_reduction <minsi>, %474, %cst_198 [0] : vector<5x1xi32> to vector<1xi32>
    %476 = vector.shape_cast %475 : vector<1xi32> to vector<1x1xi32>
    %c0_199 = arith.constant 0 : index
    %c0_200 = arith.constant 0 : index
    %477 = vector.load %arg11[%c0_199, %c0_200] : memref<1x1xf32, #tpu.memory_space<vmem>>, vector<1x1xf32>
    tpu.vector_store %arg11[%c0_199, %c0_200], %470 {strides = array<i32>} : memref<1x1xf32, #tpu.memory_space<vmem>>, vector<1x1xf32>,
    %478 = vector.broadcast %476 : vector<1x1xi32> to vector<1x128xi32>
    %479 = arith.addi %478, %309 : vector<1x128xi32>
    %c7_201 = arith.constant 7 : index
    %c0_202 = arith.constant 0 : index
    %480 = vector.load %arg13[%c7_201, %c0_202] : memref<8x128xi32, #tpu.memory_space<vmem>>, vector<1x128xi32>
    tpu.vector_store %arg13[%c7_201, %c0_202], %479 {strides = array<i32>} : memref<8x128xi32, #tpu.memory_space<vmem>>, vector<1x128xi32>,
    %c7_203 = arith.constant 7 : index
    %c0_204 = arith.constant 0 : index
    %481 = vector.load %arg19[%c7_203, %c0_204] : memref<8x128xi32, #tpu.memory_space<vmem>>, vector<1x128xi32>
    %482 = arith.cmpi eq, %307, %479 : vector<1x128xi32>
    %c0_i32_205 = arith.constant 0 : i32
    %483 = vector.broadcast %c0_i32_205 : i32 to vector<1x128xi32>
    %484 = arith.select %482, %481, %483 : vector<1x128xi1>, vector<1x128xi32>
    %cst_206 = arith.constant dense<0> : vector<1xi32>
    %485 = vector.multi_reduction <add>, %484, %cst_206 [1] : vector<1x128xi32> to vector<1xi32>
    %486 = vector.shape_cast %485 : vector<1xi32> to vector<1x1xi32>
    %487 = vector.broadcast %486 : vector<1x1xi32> to vector<1x128xi32>
    %488 = arith.addi %487, %309 : vector<1x128xi32>
    %c6_207 = arith.constant 6 : index
    %c0_208 = arith.constant 0 : index
    %489 = vector.load %arg13[%c6_207, %c0_208] : memref<8x128xi32, #tpu.memory_space<vmem>>, vector<1x128xi32>
    tpu.vector_store %arg13[%c6_207, %c0_208], %488 {strides = array<i32>} : memref<8x128xi32, #tpu.memory_space<vmem>>, vector<1x128xi32>,
    %c6_209 = arith.constant 6 : index
    %c0_210 = arith.constant 0 : index
    %490 = vector.load %arg19[%c6_209, %c0_210] : memref<8x128xi32, #tpu.memory_space<vmem>>, vector<1x128xi32>
    %491 = arith.cmpi eq, %307, %488 : vector<1x128xi32>
    %c0_i32_211 = arith.constant 0 : i32
    %492 = vector.broadcast %c0_i32_211 : i32 to vector<1x128xi32>
    %493 = arith.select %491, %490, %492 : vector<1x128xi1>, vector<1x128xi32>
    %cst_212 = arith.constant dense<0> : vector<1xi32>
    %494 = vector.multi_reduction <add>, %493, %cst_212 [1] : vector<1x128xi32> to vector<1xi32>
    %495 = vector.shape_cast %494 : vector<1xi32> to vector<1x1xi32>
    %496 = vector.broadcast %495 : vector<1x1xi32> to vector<1x128xi32>
    %497 = arith.addi %496, %309 : vector<1x128xi32>
    %c5_213 = arith.constant 5 : index
    %c0_214 = arith.constant 0 : index
    %498 = vector.load %arg13[%c5_213, %c0_214] : memref<8x128xi32, #tpu.memory_space<vmem>>, vector<1x128xi32>
    tpu.vector_store %arg13[%c5_213, %c0_214], %497 {strides = array<i32>} : memref<8x128xi32, #tpu.memory_space<vmem>>, vector<1x128xi32>,
    %c5_215 = arith.constant 5 : index
    %c0_216 = arith.constant 0 : index
    %499 = vector.load %arg19[%c5_215, %c0_216] : memref<8x128xi32, #tpu.memory_space<vmem>>, vector<1x128xi32>
    %500 = arith.cmpi eq, %307, %497 : vector<1x128xi32>
    %c0_i32_217 = arith.constant 0 : i32
    %501 = vector.broadcast %c0_i32_217 : i32 to vector<1x128xi32>
    %502 = arith.select %500, %499, %501 : vector<1x128xi1>, vector<1x128xi32>
    %cst_218 = arith.constant dense<0> : vector<1xi32>
    %503 = vector.multi_reduction <add>, %502, %cst_218 [1] : vector<1x128xi32> to vector<1xi32>
    %504 = vector.shape_cast %503 : vector<1xi32> to vector<1x1xi32>
    %505 = vector.broadcast %504 : vector<1x1xi32> to vector<1x128xi32>
    %506 = arith.addi %505, %309 : vector<1x128xi32>
    %c4_219 = arith.constant 4 : index
    %c0_220 = arith.constant 0 : index
    %507 = vector.load %arg13[%c4_219, %c0_220] : memref<8x128xi32, #tpu.memory_space<vmem>>, vector<1x128xi32>
    tpu.vector_store %arg13[%c4_219, %c0_220], %506 {strides = array<i32>} : memref<8x128xi32, #tpu.memory_space<vmem>>, vector<1x128xi32>,
    %c4_221 = arith.constant 4 : index
    %c0_222 = arith.constant 0 : index
    %508 = vector.load %arg19[%c4_221, %c0_222] : memref<8x128xi32, #tpu.memory_space<vmem>>, vector<1x128xi32>
    %509 = arith.cmpi eq, %307, %506 : vector<1x128xi32>
    %c0_i32_223 = arith.constant 0 : i32
    %510 = vector.broadcast %c0_i32_223 : i32 to vector<1x128xi32>
    %511 = arith.select %509, %508, %510 : vector<1x128xi1>, vector<1x128xi32>
    %cst_224 = arith.constant dense<0> : vector<1xi32>
    %512 = vector.multi_reduction <add>, %511, %cst_224 [1] : vector<1x128xi32> to vector<1xi32>
    %513 = vector.shape_cast %512 : vector<1xi32> to vector<1x1xi32>
    %514 = vector.broadcast %513 : vector<1x1xi32> to vector<1x128xi32>
    %515 = arith.addi %514, %309 : vector<1x128xi32>
    %c3_225 = arith.constant 3 : index
    %c0_226 = arith.constant 0 : index
    %516 = vector.load %arg13[%c3_225, %c0_226] : memref<8x128xi32, #tpu.memory_space<vmem>>, vector<1x128xi32>
    tpu.vector_store %arg13[%c3_225, %c0_226], %515 {strides = array<i32>} : memref<8x128xi32, #tpu.memory_space<vmem>>, vector<1x128xi32>,
    %c3_227 = arith.constant 3 : index
    %c0_228 = arith.constant 0 : index
    %517 = vector.load %arg19[%c3_227, %c0_228] : memref<8x128xi32, #tpu.memory_space<vmem>>, vector<1x128xi32>
    %518 = arith.cmpi eq, %307, %515 : vector<1x128xi32>
    %c0_i32_229 = arith.constant 0 : i32
    %519 = vector.broadcast %c0_i32_229 : i32 to vector<1x128xi32>
    %520 = arith.select %518, %517, %519 : vector<1x128xi1>, vector<1x128xi32>
    %cst_230 = arith.constant dense<0> : vector<1xi32>
    %521 = vector.multi_reduction <add>, %520, %cst_230 [1] : vector<1x128xi32> to vector<1xi32>
    %522 = vector.shape_cast %521 : vector<1xi32> to vector<1x1xi32>
    %523 = vector.broadcast %522 : vector<1x1xi32> to vector<1x128xi32>
    %524 = arith.addi %523, %309 : vector<1x128xi32>
    %c2_231 = arith.constant 2 : index
    %c0_232 = arith.constant 0 : index
    %525 = vector.load %arg13[%c2_231, %c0_232] : memref<8x128xi32, #tpu.memory_space<vmem>>, vector<1x128xi32>
    tpu.vector_store %arg13[%c2_231, %c0_232], %524 {strides = array<i32>} : memref<8x128xi32, #tpu.memory_space<vmem>>, vector<1x128xi32>,
    %c2_233 = arith.constant 2 : index
    %c0_234 = arith.constant 0 : index
    %526 = vector.load %arg19[%c2_233, %c0_234] : memref<8x128xi32, #tpu.memory_space<vmem>>, vector<1x128xi32>
    %527 = arith.cmpi eq, %307, %524 : vector<1x128xi32>
    %c0_i32_235 = arith.constant 0 : i32
    %528 = vector.broadcast %c0_i32_235 : i32 to vector<1x128xi32>
    %529 = arith.select %527, %526, %528 : vector<1x128xi1>, vector<1x128xi32>
    %cst_236 = arith.constant dense<0> : vector<1xi32>
    %530 = vector.multi_reduction <add>, %529, %cst_236 [1] : vector<1x128xi32> to vector<1xi32>
    %531 = vector.shape_cast %530 : vector<1xi32> to vector<1x1xi32>
    %532 = vector.broadcast %531 : vector<1x1xi32> to vector<1x128xi32>
    %533 = arith.addi %532, %309 : vector<1x128xi32>
    %c1_237 = arith.constant 1 : index
    %c0_238 = arith.constant 0 : index
    %534 = vector.load %arg13[%c1_237, %c0_238] : memref<8x128xi32, #tpu.memory_space<vmem>>, vector<1x128xi32>
    tpu.vector_store %arg13[%c1_237, %c0_238], %533 {strides = array<i32>} : memref<8x128xi32, #tpu.memory_space<vmem>>, vector<1x128xi32>,
    %c1_239 = arith.constant 1 : index
    %c0_240 = arith.constant 0 : index
    %535 = vector.load %arg19[%c1_239, %c0_240] : memref<8x128xi32, #tpu.memory_space<vmem>>, vector<1x128xi32>
    %536 = arith.cmpi eq, %307, %533 : vector<1x128xi32>
    %c0_i32_241 = arith.constant 0 : i32
    %537 = vector.broadcast %c0_i32_241 : i32 to vector<1x128xi32>
    %538 = arith.select %536, %535, %537 : vector<1x128xi1>, vector<1x128xi32>
    %cst_242 = arith.constant dense<0> : vector<1xi32>
    %539 = vector.multi_reduction <add>, %538, %cst_242 [1] : vector<1x128xi32> to vector<1xi32>
    %540 = vector.shape_cast %539 : vector<1xi32> to vector<1x1xi32>
    %541 = vector.broadcast %540 : vector<1x1xi32> to vector<1x128xi32>
    %542 = arith.addi %541, %309 : vector<1x128xi32>
    %c0_243 = arith.constant 0 : index
    %c0_244 = arith.constant 0 : index
    %543 = vector.load %arg13[%c0_243, %c0_244] : memref<8x128xi32, #tpu.memory_space<vmem>>, vector<1x128xi32>
    tpu.vector_store %arg13[%c0_243, %c0_244], %542 {strides = array<i32>} : memref<8x128xi32, #tpu.memory_space<vmem>>, vector<1x128xi32>,
    %c0_245 = arith.constant 0 : index
    %c0_246 = arith.constant 0 : index
    %544 = vector.load %arg19[%c0_245, %c0_246] : memref<8x128xi32, #tpu.memory_space<vmem>>, vector<1x128xi32>
    %545 = arith.cmpi eq, %307, %542 : vector<1x128xi32>
    %c0_i32_247 = arith.constant 0 : i32
    %546 = vector.broadcast %c0_i32_247 : i32 to vector<1x128xi32>
    %547 = arith.select %545, %544, %546 : vector<1x128xi1>, vector<1x128xi32>
    %cst_248 = arith.constant dense<0> : vector<1xi32>
    %548 = vector.multi_reduction <add>, %547, %cst_248 [1] : vector<1x128xi32> to vector<1xi32>
    %549 = vector.shape_cast %548 : vector<1xi32> to vector<1x1xi32>
    %550 = vector.broadcast %549 : vector<1x1xi32> to vector<1x128xi32>
    %551 = arith.addi %550, %309 : vector<1x128xi32>
    %552 = vector.extract_strided_slice %551 {offsets = [0, 0], sizes = [1, 1], strides = [1, 1]} : vector<1x128xi32> to vector<1x1xi32>
    %c0_249 = arith.constant 0 : index
    %c0_250 = arith.constant 0 : index
    %553 = vector.load %arg12[%c0_249, %c0_250] : memref<1x1xi32, #tpu.memory_space<vmem>>, vector<1x1xi32>
    tpu.vector_store %arg12[%c0_249, %c0_250], %552 {strides = array<i32>} : memref<1x1xi32, #tpu.memory_space<vmem>>, vector<1x1xi32>,
    return
  }
}

</mosaic_0001>

<llo_original>
// kernel: tpu_custom_call.1
$region0: #{tpu_custom_call.1}
  #allocation0 [shape = 'u32[]', space=smem, size = 0x4, offset = 0x4, fixed_abs, tag = 'smem constant byte address 0x4 - core index']
  #allocation1 [shape = 'u32[144,128]{1,0:T(1,128)}', space=vmem, size = 0x12000, scoped, tag = 'internal scratch']
  #allocation2 [shape = 'f32[8,128]{1,0:T(8,128)}', space=vmem, size = 0x1000, scoped, tag = 'scratch operand']
  #allocation3 [shape = 'f32[8,128]{1,0:T(8,128)}', space=vmem, size = 0x1000, scoped, tag = 'scratch operand']
  #allocation4 [shape = 'f32[8,16]{1,0:T(8,128)}', space=vmem, size = 0x1000, scoped, tag = 'scratch operand']
  #allocation5 [shape = 'f32[8,16]{1,0:T(8,128)}', space=vmem, size = 0x1000, scoped, tag = 'scratch operand']
  #allocation6 [shape = 'f32[8,128]{1,0:T(8,128)}', space=vmem, size = 0x1000, scoped, tag = 'scratch operand']
  #allocation7 [shape = 's32[8,128]{1,0:T(8,128)}', space=vmem, size = 0x1000, scoped, tag = 'scratch operand']
  %s0 = inlined_call_operand.hbm [shape: f32[8,16], index: 0, kind: input, shape index: {}]
  %s1 = inlined_call_operand.hbm [shape: f32[16,128], index: 1, kind: input, shape index: {}]
  %s2 = inlined_call_operand.hbm [shape: f32[16,128], index: 2, kind: input, shape index: {}]
  %s3 = inlined_call_operand.hbm [shape: f32[32,128], index: 3, kind: input, shape index: {}]
  %s4 = inlined_call_operand.vmem [shape: f32[1,128], index: 4, kind: input, shape index: {}]
  %s5 = inlined_call_operand.vmem [shape: f32[1,32], index: 5, kind: input, shape index: {}]
  %s6 = inlined_call_operand.hbm [shape: f32[1,32], index: 6, kind: input, shape index: {}]
  %s7 = inlined_call_operand.vmem [shape: f32[16,128], index: 7, kind: input, shape index: {}]
  %s8 = inlined_call_operand.hbm [shape: f32[16,128], index: 8, kind: input, shape index: {}]
  %s9 = inlined_call_operand.vmem [shape: f32[1,128], index: 9, kind: input, shape index: {}]
  %s10 = inlined_call_operand.vmem [shape: f32[5,128], index: 10, kind: input, shape index: {}]
  %s11 = inlined_call_operand.hbm [shape: f32[1,1], index: 11, kind: output, shape index: {0}]
  %s12 = inlined_call_operand.hbm [shape: s32[1,1], index: 12, kind: output, shape index: {1}]
  %s13 = inlined_call_operand.hbm [shape: s32[8,128], index: 13, kind: output, shape index: {2}]
  %14 = xla_tuple %s11, %s12, %s13
  %s15 = sld [smem:[#allocation0]]
  $region94: #{tpu_custom_call.1} parent=0
    _
  %s17 = ssub.s32 1, %s15
  %s18 = scalar_select 0, %s17, %s15
  $region1: #{tpu_custom_call.1} parent=0
    #allocation8 [shape = 'u8[4096]{0}', space=vmem, size = 0x1000, scoped, tag = 'input window, operand 0, single buffered']
    #allocation9 [shape = 's32[1]{0}', space=sflag, size = 0x4, scoped, tag = 'scoped memory for tpu_custom_call.1']
    #allocation10 [shape = 's32[1]{0}', space=sflag, size = 0x4, scoped, tag = 'scoped memory for tpu_custom_call.1']
    #allocation11 [shape = 'u8[8192]{0}', space=vmem, size = 0x2000, scoped, tag = 'input window, operand 1, single buffered']
    #allocation12 [shape = 's32[1]{0}', space=sflag, size = 0x4, scoped, tag = 'scoped memory for tpu_custom_call.1']
    #allocation13 [shape = 'u8[8192]{0}', space=vmem, size = 0x2000, scoped, tag = 'input window, operand 2, single buffered']
    #allocation14 [shape = 'u8[16384]{0}', space=vmem, size = 0x4000, scoped, tag = 'input window, operand 3, single buffered']
    #allocation15 [shape = 's32[1]{0}', space=sflag, size = 0x4, scoped, tag = 'scoped memory for tpu_custom_call.1']
    #allocation16 [shape = 'u8[512]{0}', space=vmem, size = 0x400, scoped, tag = 'input window, operand 6, single buffered']
    #allocation17 [shape = 'u8[8192]{0}', space=vmem, size = 0x2000, scoped, tag = 'input window, operand 8, single buffered']
    #allocation18 [shape = 's32[1]{0}', space=sflag, size = 0x4, scoped, tag = 'scoped memory for tpu_custom_call.1']
    #allocation19 [shape = 'u8[512]{0}', space=vmem, size = 0x400, scoped, tag = 'output window, operand 0, single buffered']
    #allocation20 [shape = 'u8[512]{0}', space=vmem, size = 0x400, scoped, tag = 'output window, operand 1, single buffered']
    #allocation21 [shape = 's32[1]{0}', space=sflag, size = 0x4, scoped, tag = 'scoped memory for tpu_custom_call.1']
    #allocation22 [shape = 'u8[4096]{0}', space=vmem, size = 0x1000, scoped, tag = 'output window, operand 2, single buffered']
    %19 = vsyncpa [#allocation9], 0
    %20 = vsyncpa [#allocation12], 0
    %21 = vsyncpa [#allocation15], 0
    %22 = vsyncpa [#allocation18], 0
    %23 = vsyncpa [#allocation10], 0
    %24 = vsyncpa [#allocation21], 0
    // Predicated region
    $region2: #{tpu_custom_call.1} parent=1 // pred_check
      _
    $region3: #{tpu_custom_call.1} parent=1 // pred_check_branch
      %26 = sbr.rel (0) target = $region5
    $region4: #{tpu_custom_call.1} parent=1 // pred_region
      %s28 = ssub.s32 128, 128
      %29 = vsyncadd [#allocation9], %s28
      %s31 = sshll.u32 [#allocation8], 4
      %s32 = int_to_ptr.vmem [resolvable:$true] %s31
      %34 = dma.hbm_to_vmem [thread:$0]  %s0, 128, %s32, [#allocation9]
    $region5: #{tpu_custom_call.1} parent=1 // pred_fallthru
      _
    // Predicated region
    $region6: #{tpu_custom_call.1} parent=1 // pred_check
      _
    $region7: #{tpu_custom_call.1} parent=1 // pred_check_branch
      %36 = sbr.rel (0) target = $region9
    $region8: #{tpu_custom_call.1} parent=1 // pred_region
      %s38 = ssub.s32 256, 256
      %39 = vsyncadd [#allocation12], %s38
      %s40 = sshll.u32 [#allocation11], 4
      %s41 = int_to_ptr.vmem [resolvable:$true] %s40
      %46 = dma.hbm_to_vmem [thread:$0]  %s1, 256, %s41, [#allocation12], 128, 128, 8
    $region9: #{tpu_custom_call.1} parent=1 // pred_fallthru
      _
    // Predicated region
    $region10: #{tpu_custom_call.1} parent=1 // pred_check
      _
    $region11: #{tpu_custom_call.1} parent=1 // pred_check_branch
      %48 = sbr.rel (0) target = $region13
    $region12: #{tpu_custom_call.1} parent=1 // pred_region
      %s50 = ssub.s32 256, 256
      %51 = vsyncadd [#allocation12], %s50
      %s52 = sshll.u32 [#allocation13], 4
      %s53 = int_to_ptr.vmem [resolvable:$true] %s52
      %58 = dma.hbm_to_vmem [thread:$0]  %s2, 256, %s53, [#allocation12], 128, 128, 8
    $region13: #{tpu_custom_call.1} parent=1 // pred_fallthru
      _
    // Predicated region
    $region14: #{tpu_custom_call.1} parent=1 // pred_check
      _
    $region15: #{tpu_custom_call.1} parent=1 // pred_check_branch
      %60 = sbr.rel (0) target = $region17
    $region16: #{tpu_custom_call.1} parent=1 // pred_region
      %s62 = ssub.s32 512, 512
      %63 = vsyncadd [#allocation15], %s62
      %s64 = sshll.u32 [#allocation14], 4
      %s65 = int_to_ptr.vmem [resolvable:$true] %s64
      %70 = dma.hbm_to_vmem [thread:$0]  %s3, 512, %s65, [#allocation15], 128, 128, 8
    $region17: #{tpu_custom_call.1} parent=1 // pred_fallthru
      _
    // Predicated region
    $region18: #{tpu_custom_call.1} parent=1 // pred_check
      _
    $region19: #{tpu_custom_call.1} parent=1 // pred_check_branch
      %72 = sbr.rel (0) target = $region21
    $region20: #{tpu_custom_call.1} parent=1 // pred_region
      _
    $region21: #{tpu_custom_call.1} parent=1 // pred_fallthru
      _
    // Predicated region
    $region22: #{tpu_custom_call.1} parent=1 // pred_check
      _
    $region23: #{tpu_custom_call.1} parent=1 // pred_check_branch
      %74 = sbr.rel (0) target = $region25
    $region24: #{tpu_custom_call.1} parent=1 // pred_region
      _
    $region25: #{tpu_custom_call.1} parent=1 // pred_fallthru
      _
    // Predicated region
    $region26: #{tpu_custom_call.1} parent=1 // pred_check
      _
    $region27: #{tpu_custom_call.1} parent=1 // pred_check_branch
      %76 = sbr.rel (0) target = $region29
    $region28: #{tpu_custom_call.1} parent=1 // pred_region
      %s78 = ssub.s32 16, 16
      %79 = vsyncadd [#allocation15], %s78
      %s81 = sshll.u32 [#allocation16], 4
      %s82 = int_to_ptr.vmem [resolvable:$true] %s81
      %84 = dma.hbm_to_vmem [thread:$0]  %s6, 16, %s82, [#allocation15]
    $region29: #{tpu_custom_call.1} parent=1 // pred_fallthru
      _
    // Predicated region
    $region30: #{tpu_custom_call.1} parent=1 // pred_check
      _
    $region31: #{tpu_custom_call.1} parent=1 // pred_check_branch
      %86 = sbr.rel (0) target = $region33
    $region32: #{tpu_custom_call.1} parent=1 // pred_region
      _
    $region33: #{tpu_custom_call.1} parent=1 // pred_fallthru
      _
    // Predicated region
    $region34: #{tpu_custom_call.1} parent=1 // pred_check
      _
    $region35: #{tpu_custom_call.1} parent=1 // pred_check_branch
      %88 = sbr.rel (0) target = $region37
    $region36: #{tpu_custom_call.1} parent=1 // pred_region
      %s90 = ssub.s32 256, 256
      %91 = vsyncadd [#allocation18], %s90
      %s92 = sshll.u32 [#allocation17], 4
      %s93 = int_to_ptr.vmem [resolvable:$true] %s92
      %98 = dma.hbm_to_vmem [thread:$0]  %s8, 256, %s93, [#allocation18], 128, 128, 8
    $region37: #{tpu_custom_call.1} parent=1 // pred_fallthru
      _
    // Predicated region
    $region38: #{tpu_custom_call.1} parent=1 // pred_check
      _
    $region39: #{tpu_custom_call.1} parent=1 // pred_check_branch
      %100 = sbr.rel (0) target = $region41
    $region40: #{tpu_custom_call.1} parent=1 // pred_region
      _
    $region41: #{tpu_custom_call.1} parent=1 // pred_fallthru
      _
    // Predicated region
    $region42: #{tpu_custom_call.1} parent=1 // pred_check
      _
    $region43: #{tpu_custom_call.1} parent=1 // pred_check_branch
      %102 = sbr.rel (0) target = $region45
    $region44: #{tpu_custom_call.1} parent=1 // pred_region
      _
    $region45: #{tpu_custom_call.1} parent=1 // pred_fallthru
      _
    // Predicated region
    $region46: #{tpu_custom_call.1} parent=1 // pred_check
      _
    $region47: #{tpu_custom_call.1} parent=1 // pred_check_branch
      %104 = sbr.rel (0) target = $region49
    $region48: #{tpu_custom_call.1} parent=1 // pred_region
      %105 = dma.done [#allocation9], 128
    $region49: #{tpu_custom_call.1} parent=1 // pred_fallthru
      _
    // Predicated region
    $region50: #{tpu_custom_call.1} parent=1 // pred_check
      _
    $region51: #{tpu_custom_call.1} parent=1 // pred_check_branch
      %107 = sbr.rel (0) target = $region53
    $region52: #{tpu_custom_call.1} parent=1 // pred_region
      %108 = dma.done [#allocation12], 256
    $region53: #{tpu_custom_call.1} parent=1 // pred_fallthru
      _
    // Predicated region
    $region54: #{tpu_custom_call.1} parent=1 // pred_check
      _
    $region55: #{tpu_custom_call.1} parent=1 // pred_check_branch
      %110 = sbr.rel (0) target = $region57
    $region56: #{tpu_custom_call.1} parent=1 // pred_region
      %111 = dma.done [#allocation12], 256
    $region57: #{tpu_custom_call.1} parent=1 // pred_fallthru
      _
    // Predicated region
    $region58: #{tpu_custom_call.1} parent=1 // pred_check
      _
    $region59: #{tpu_custom_call.1} parent=1 // pred_check_branch
      %113 = sbr.rel (0) target = $region61
    $region60: #{tpu_custom_call.1} parent=1 // pred_region
      %114 = dma.done [#allocation15], 512
    $region61: #{tpu_custom_call.1} parent=1 // pred_fallthru
      _
    // Predicated region
    $region62: #{tpu_custom_call.1} parent=1 // pred_check
      _
    $region63: #{tpu_custom_call.1} parent=1 // pred_check_branch
      %116 = sbr.rel (0) target = $region65
    $region64: #{tpu_custom_call.1} parent=1 // pred_region
      %117 = dma.done [#allocation15], 16
    $region65: #{tpu_custom_call.1} parent=1 // pred_fallthru
      _
    // Predicated region
    $region66: #{tpu_custom_call.1} parent=1 // pred_check
      _
    $region67: #{tpu_custom_call.1} parent=1 // pred_check_branch
      %119 = sbr.rel (0) target = $region69
    $region68: #{tpu_custom_call.1} parent=1 // pred_region
      %120 = dma.done [#allocation18], 256
    $region69: #{tpu_custom_call.1} parent=1 // pred_fallthru
      _
    %v121 = vld [vmem:[#allocation8] sm:$0xff]
    %v122 = vld [vmem:[#allocation11] sm:$0xff]
    %v123 = vld [vmem:[#allocation11 + $0x8] sm:$0xff]
    %vm124 = vcmask 130048
    %v126 = vsel %vm124, %v121, 0
    %128 = vmatprep.subr.mxu0 0.0
    %129 = vmatpush1.msra.mxu0 %v122
    %130 = vmatprep.subr.mxu0 0.0
    %131 = vmatpush1.msra.mxu0 %v123
    %132 = vmatprep.subr.mxu0 0.0
    %133 = vmatpush1.msra.mxu0 0.0
    %134 = vmatprep.subr.mxu0 0.0
    %135 = vmatpush1.msra.mxu0 0.0
    %136 = vmatprep.subr.mxu0 0.0
    %137 = vmatpush1.msra.mxu0 0.0
    %138 = vmatprep.subr.mxu0 0.0
    %139 = vmatpush1.msra.mxu0 0.0
    %140 = vmatprep.subr.mxu0 0.0
    %141 = vmatpush1.msra.mxu0 0.0
    %142 = vmatprep.subr.mxu0 0.0
    %143 = vmatpush1.msra.mxu0 0.0
    %144 = vmatprep.subr.mxu0 0.0
    %145 = vmatpush1.msra.mxu0 0.0
    %146 = vmatprep.subr.mxu0 0.0
    %147 = vmatpush1.msra.mxu0 0.0
    %148 = vmatprep.subr.mxu0 0.0
    %149 = vmatpush1.msra.mxu0 0.0
    %150 = vmatprep.subr.mxu0 0.0
    %151 = vmatpush1.msra.mxu0 0.0
    %152 = vmatprep.subr.mxu0 0.0
    %153 = vmatpush1.msra.mxu0 0.0
    %154 = vmatprep.subr.mxu0 0.0
    %155 = vmatpush1.msra.mxu0 0.0
    %156 = vmatprep.subr.mxu0 0.0
    %157 = vmatpush1.msra.mxu0 0.0
    %158 = vmatprep.subr.mxu0 0.0
    %159 = vmatpush1.msra.mxu0 0.0
    %160 = vmatprep.subr.mxu0 0.0
    %161 = vmatpush1.msra.mxu0 0.0
    %162 = vmatprep.subr.mxu0 0.0
    %163 = vmatpush1.msra.mxu0 0.0
    %164 = vmatprep.subr.mxu0 0.0
    %165 = vmatpush1.msra.mxu0 0.0
    %166 = vmatprep.subr.mxu0 0.0
    %167 = vmatpush1.msra.mxu0 0.0
    %168 = vmatprep.subr.mxu0 0.0
    %169 = vmatpush1.msra.mxu0 0.0
    %170 = vmatprep.subr.mxu0 0.0
    %171 = vmatpush1.msra.mxu0 0.0
    %172 = vmatprep.subr.mxu0 0.0
    %173 = vmatpush1.msra.mxu0 0.0
    %174 = vmatprep.subr.mxu0 0.0
    %175 = vmatpush1.msra.mxu0 0.0
    %176 = vmatprep.subr.mxu0 0.0
    %177 = vmatpush1.msra.mxu0 0.0
    %178 = vmatprep.subr.mxu0 0.0
    %179 = vmatpush1.msra.mxu0 0.0
    %180 = vmatprep.subr.mxu0 0.0
    %181 = vmatpush1.msra.mxu0 0.0
    %182 = vmatprep.subr.mxu0 0.0
    %183 = vmatpush1.msra.mxu0 0.0
    %184 = vmatprep.subr.mxu0 0.0
    %185 = vmatpush1.msra.mxu0 0.0
    %186 = vmatprep.subr.mxu0 0.0
    %187 = vmatpush1.msra.mxu0 0.0
    %188 = vmatprep.subr.mxu0 0.0
    %189 = vmatpush1.msra.mxu0 0.0
    %190 = vmatprep.subr.mxu0 0.0
    %191 = vmatpush1.msra.mxu0 0.0
    %192 = vmatprep.mubr.f32.mxu0 0.0
    %193 = vmatmul.mubr.f32.gmra.mrb[0].mxu0 %v126
    %v194 = vpop.f32.mrb[0].mxu0
    %v195 = vadd.f32 0.0, %v194
    %v196 = vpop.f32.mrb[0].mxu0
    %197 = vdwg.mxu0
    %198 = vst [vmem:[#allocation2] sm:$0xff] %v195
    %v199 = vld [vmem:[#allocation13] sm:$0xff]
    %v200 = vld [vmem:[#allocation13 + $0x8] sm:$0xff]
    %201 = vmatprep.subr.mxu0 0.0
    %202 = vmatpush1.msra.mxu0 %v199
    %203 = vmatprep.subr.mxu0 0.0
    %204 = vmatpush1.msra.mxu0 %v200
    %205 = vmatprep.subr.mxu0 0.0
    %206 = vmatpush1.msra.mxu0 0.0
    %207 = vmatprep.subr.mxu0 0.0
    %208 = vmatpush1.msra.mxu0 0.0
    %209 = vmatprep.subr.mxu0 0.0
    %210 = vmatpush1.msra.mxu0 0.0
    %211 = vmatprep.subr.mxu0 0.0
    %212 = vmatpush1.msra.mxu0 0.0
    %213 = vmatprep.subr.mxu0 0.0
    %214 = vmatpush1.msra.mxu0 0.0
    %215 = vmatprep.subr.mxu0 0.0
    %216 = vmatpush1.msra.mxu0 0.0
    %217 = vmatprep.subr.mxu0 0.0
    %218 = vmatpush1.msra.mxu0 0.0
    %219 = vmatprep.subr.mxu0 0.0
    %220 = vmatpush1.msra.mxu0 0.0
    %221 = vmatprep.subr.mxu0 0.0
    %222 = vmatpush1.msra.mxu0 0.0
    %223 = vmatprep.subr.mxu0 0.0
    %224 = vmatpush1.msra.mxu0 0.0
    %225 = vmatprep.subr.mxu0 0.0
    %226 = vmatpush1.msra.mxu0 0.0
    %227 = vmatprep.subr.mxu0 0.0
    %228 = vmatpush1.msra.mxu0 0.0
    %229 = vmatprep.subr.mxu0 0.0
    %230 = vmatpush1.msra.mxu0 0.0
    %231 = vmatprep.subr.mxu0 0.0
    %232 = vmatpush1.msra.mxu0 0.0
    %233 = vmatprep.subr.mxu0 0.0
    %234 = vmatpush1.msra.mxu0 0.0
    %235 = vmatprep.subr.mxu0 0.0
    %236 = vmatpush1.msra.mxu0 0.0
    %237 = vmatprep.subr.mxu0 0.0
    %238 = vmatpush1.msra.mxu0 0.0
    %239 = vmatprep.subr.mxu0 0.0
    %240 = vmatpush1.msra.mxu0 0.0
    %241 = vmatprep.subr.mxu0 0.0
    %242 = vmatpush1.msra.mxu0 0.0
    %243 = vmatprep.subr.mxu0 0.0
    %244 = vmatpush1.msra.mxu0 0.0
    %245 = vmatprep.subr.mxu0 0.0
    %246 = vmatpush1.msra.mxu0 0.0
    %247 = vmatprep.subr.mxu0 0.0
    %248 = vmatpush1.msra.mxu0 0.0
    %249 = vmatprep.subr.mxu0 0.0
    %250 = vmatpush1.msra.mxu0 0.0
    %251 = vmatprep.subr.mxu0 0.0
    %252 = vmatpush1.msra.mxu0 0.0
    %253 = vmatprep.subr.mxu0 0.0
    %254 = vmatpush1.msra.mxu0 0.0
    %255 = vmatprep.subr.mxu0 0.0
    %256 = vmatpush1.msra.mxu0 0.0
    %257 = vmatprep.subr.mxu0 0.0
    %258 = vmatpush1.msra.mxu0 0.0
    %259 = vmatprep.subr.mxu0 0.0
    %260 = vmatpush1.msra.mxu0 0.0
    %261 = vmatprep.subr.mxu0 0.0
    %262 = vmatpush1.msra.mxu0 0.0
    %263 = vmatprep.subr.mxu0 0.0
    %264 = vmatpush1.msra.mxu0 0.0
    %265 = vmatprep.mubr.f32.mxu0 0.0
    %266 = vmatmul.mubr.f32.gmra.mrb[0].mxu0 %v126
    %v267 = vpop.f32.mrb[0].mxu0
    %v268 = vadd.f32 0.0, %v267
    %v269 = vpop.f32.mrb[0].mxu0
    %270 = vdwg.mxu0
    %271 = vst [vmem:[#allocation3] sm:$0xff] %v268
    %v272 = vld [vmem:[#allocation14] sm:$0xff]
    %v273 = vld [vmem:[#allocation14 + $0x8] sm:$0xff]
    %v274 = vld [vmem:[#allocation14 + $0x10] sm:$0xff]
    %v275 = vld [vmem:[#allocation14 + $0x18] sm:$0xff]
    %v276 = vld [vmem:[%s4] sm:$0x1]
    %v277 = vld [vmem:[%s5] sm:$0x1]
    %v278 = vld [vmem:[#allocation16] sm:$0x1]
    %v279 = vld [vmem:[#allocation2] sm:$0x1]
    %v280 = vld [vmem:[#allocation3 + $0x7] sm:$0x1]
    %v281 = vadd.f32 %v279, %v280
    %vm282 = vcmask 261120
    %v284 = vsel %vm282, %v277, 0
    %286 = vmatprep.subr.mxu0 0.0
    %287 = vmatpush1.msra.mxu0 %v272
    %288 = vmatprep.subr.mxu0 0.0
    %289 = vmatpush1.msra.mxu0 %v273
    %290 = vmatprep.subr.mxu0 0.0
    %291 = vmatpush1.msra.mxu0 %v274
    %292 = vmatprep.subr.mxu0 0.0
    %293 = vmatpush1.msra.mxu0 %v275
    %294 = vmatprep.subr.mxu0 0.0
    %295 = vmatpush1.msra.mxu0 0.0
    %296 = vmatprep.subr.mxu0 0.0
    %297 = vmatpush1.msra.mxu0 0.0
    %298 = vmatprep.subr.mxu0 0.0
    %299 = vmatpush1.msra.mxu0 0.0
    %300 = vmatprep.subr.mxu0 0.0
    %301 = vmatpush1.msra.mxu0 0.0
    %302 = vmatprep.subr.mxu0 0.0
    %303 = vmatpush1.msra.mxu0 0.0
    %304 = vmatprep.subr.mxu0 0.0
    %305 = vmatpush1.msra.mxu0 0.0
    %306 = vmatprep.subr.mxu0 0.0
    %307 = vmatpush1.msra.mxu0 0.0
    %308 = vmatprep.subr.mxu0 0.0
    %309 = vmatpush1.msra.mxu0 0.0
    %310 = vmatprep.subr.mxu0 0.0
    %311 = vmatpush1.msra.mxu0 0.0
    %312 = vmatprep.subr.mxu0 0.0
    %313 = vmatpush1.msra.mxu0 0.0
    %314 = vmatprep.subr.mxu0 0.0
    %315 = vmatpush1.msra.mxu0 0.0
    %316 = vmatprep.subr.mxu0 0.0
    %317 = vmatpush1.msra.mxu0 0.0
    %318 = vmatprep.subr.mxu0 0.0
    %319 = vmatpush1.msra.mxu0 0.0
    %320 = vmatprep.subr.mxu0 0.0
    %321 = vmatpush1.msra.mxu0 0.0
    %322 = vmatprep.subr.mxu0 0.0
    %323 = vmatpush1.msra.mxu0 0.0
    %324 = vmatprep.subr.mxu0 0.0
    %325 = vmatpush1.msra.mxu0 0.0
    %326 = vmatprep.subr.mxu0 0.0
    %327 = vmatpush1.msra.mxu0 0.0
    %328 = vmatprep.subr.mxu0 0.0
    %329 = vmatpush1.msra.mxu0 0.0
    %330 = vmatprep.subr.mxu0 0.0
    %331 = vmatpush1.msra.mxu0 0.0
    %332 = vmatprep.subr.mxu0 0.0
    %333 = vmatpush1.msra.mxu0 0.0
    %334 = vmatprep.subr.mxu0 0.0
    %335 = vmatpush1.msra.mxu0 0.0
    %336 = vmatprep.subr.mxu0 0.0
    %337 = vmatpush1.msra.mxu0 0.0
    %338 = vmatprep.subr.mxu0 0.0
    %339 = vmatpush1.msra.mxu0 0.0
    %340 = vmatprep.subr.mxu0 0.0
    %341 = vmatpush1.msra.mxu0 0.0
    %342 = vmatprep.subr.mxu0 0.0
    %343 = vmatpush1.msra.mxu0 0.0
    %344 = vmatprep.subr.mxu0 0.0
    %345 = vmatpush1.msra.mxu0 0.0
    %346 = vmatprep.subr.mxu0 0.0
    %347 = vmatpush1.msra.mxu0 0.0
    %348 = vmatprep.subr.mxu0 0.0
    %349 = vmatpush1.msra.mxu0 0.0
    %350 = vmatprep.mubr.f32.mxu0 0.0
    %351 = vmatmul.mubr.f32.gmra.mrb[0].mxu0 %v284
    %v352 = vpop.f32.mrb[0].mxu0
    %v353 = vadd.f32 0.0, %v352
    %v354 = vpop.f32.mrb[0].mxu0
    %355 = vdwg.mxu0
    %v356 = vadd.f32 %v281, %v353
    %v357 = vadd.f32 %v356, %v276
    %v358 = vxor.u32 %v357, 2147483648
    %v359 = vmul.f32 %v358, 1.442695
    %v360 = vpow.pop %v359
    %v361 = vadd.f32 %v360, 1.0
    %v362 = vrcp.pop %v361
    %v363 = vmul.f32 1.0, %v362
    %v364 = vtanh.pop %v357
    %v366 = vlaneseq
    %v367 = vshrl.u32 %v366, 7
    %v368 = vsub.s32 0, %v367
    %v369 = vrot.slane %v278, %v368
    %370 = vrot.lane.b32.xlu0 %v369, 32
    %v371 = vpop.permute.xlu0 %370
    %v373 = vmul.f32 %v363, %v371
    %375 = vrot.lane.b32.xlu0 %v364, 64
    %v376 = vpop.permute.xlu0 %375
    %v378 = vmul.f32 %v363, %v376
    %380 = vrot.lane.b32.xlu0 %v378, 32
    %v381 = vpop.permute.xlu0 %380
    %v383 = vadd.f32 %v373, %v381
    %v384 = vtanh.pop %v383
    %386 = vrot.lane.b32.xlu0 %v384, 64
    %v387 = vpop.permute.xlu0 %386
    %v389 = vmul.f32 %v363, %v387
    %391 = vrot.lane.b32.xlu0 %v389, 32
    %v392 = vpop.permute.xlu0 %391
    %vm394 = vcmask 122880
    %395 = vst.msk [vmem:[#allocation4] sm:$0x1] %vm394, %v392
    %396 = vrot.lane.b32.xlu0 %v389, 16
    %v397 = vpop.permute.xlu0 %396
    %399 = vst.msk [vmem:[#allocation5 + $0x7] sm:$0x1] %vm394, %v397
    %v400 = vld [vmem:[#allocation2 + $0x1] sm:$0x1]
    %v401 = vld [vmem:[#allocation3 + $0x6] sm:$0x1]
    %v402 = vadd.f32 %v400, %v401
    %v403 = vsel %vm282, %v392, 0
    %405 = vmatprep.subr.mxu0 0.0
    %406 = vmatpush1.msra.mxu0 %v272
    %407 = vmatprep.subr.mxu0 0.0
    %408 = vmatpush1.msra.mxu0 %v273
    %409 = vmatprep.subr.mxu0 0.0
    %410 = vmatpush1.msra.mxu0 %v274
    %411 = vmatprep.subr.mxu0 0.0
    %412 = vmatpush1.msra.mxu0 %v275
    %413 = vmatprep.subr.mxu0 0.0
    %414 = vmatpush1.msra.mxu0 0.0
    %415 = vmatprep.subr.mxu0 0.0
    %416 = vmatpush1.msra.mxu0 0.0
    %417 = vmatprep.subr.mxu0 0.0
    %418 = vmatpush1.msra.mxu0 0.0
    %419 = vmatprep.subr.mxu0 0.0
    %420 = vmatpush1.msra.mxu0 0.0
    %421 = vmatprep.subr.mxu0 0.0
    %422 = vmatpush1.msra.mxu0 0.0
    %423 = vmatprep.subr.mxu0 0.0
    %424 = vmatpush1.msra.mxu0 0.0
    %425 = vmatprep.subr.mxu0 0.0
    %426 = vmatpush1.msra.mxu0 0.0
    %427 = vmatprep.subr.mxu0 0.0
    %428 = vmatpush1.msra.mxu0 0.0
    %429 = vmatprep.subr.mxu0 0.0
    %430 = vmatpush1.msra.mxu0 0.0
    %431 = vmatprep.subr.mxu0 0.0
    %432 = vmatpush1.msra.mxu0 0.0
    %433 = vmatprep.subr.mxu0 0.0
    %434 = vmatpush1.msra.mxu0 0.0
    %435 = vmatprep.subr.mxu0 0.0
    %436 = vmatpush1.msra.mxu0 0.0
    %437 = vmatprep.subr.mxu0 0.0
    %438 = vmatpush1.msra.mxu0 0.0
    %439 = vmatprep.subr.mxu0 0.0
    %440 = vmatpush1.msra.mxu0 0.0
    %441 = vmatprep.subr.mxu0 0.0
    %442 = vmatpush1.msra.mxu0 0.0
    %443 = vmatprep.subr.mxu0 0.0
    %444 = vmatpush1.msra.mxu0 0.0
    %445 = vmatprep.subr.mxu0 0.0
    %446 = vmatpush1.msra.mxu0 0.0
    %447 = vmatprep.subr.mxu0 0.0
    %448 = vmatpush1.msra.mxu0 0.0
    %449 = vmatprep.subr.mxu0 0.0
    %450 = vmatpush1.msra.mxu0 0.0
    %451 = vmatprep.subr.mxu0 0.0
    %452 = vmatpush1.msra.mxu0 0.0
    %453 = vmatprep.subr.mxu0 0.0
    %454 = vmatpush1.msra.mxu0 0.0
    %455 = vmatprep.subr.mxu0 0.0
    %456 = vmatpush1.msra.mxu0 0.0
    %457 = vmatprep.subr.mxu0 0.0
    %458 = vmatpush1.msra.mxu0 0.0
    %459 = vmatprep.subr.mxu0 0.0
    %460 = vmatpush1.msra.mxu0 0.0
    %461 = vmatprep.subr.mxu0 0.0
    %462 = vmatpush1.msra.mxu0 0.0
    %463 = vmatprep.subr.mxu0 0.0
    %464 = vmatpush1.msra.mxu0 0.0
    %465 = vmatprep.subr.mxu0 0.0
    %466 = vmatpush1.msra.mxu0 0.0
    %467 = vmatprep.subr.mxu0 0.0
    %468 = vmatpush1.msra.mxu0 0.0
    %469 = vmatprep.mubr.f32.mxu0 0.0
    %470 = vmatmul.mubr.f32.gmra.mrb[0].mxu0 %v403
    %v471 = vpop.f32.mrb[0].mxu0
    %v472 = vadd.f32 0.0, %v471
    %v473 = vpop.f32.mrb[0].mxu0
    %474 = vdwg.mxu0
    %v475 = vadd.f32 %v402, %v472
    %v476 = vadd.f32 %v475, %v276
    %v477 = vxor.u32 %v476, 2147483648
    %v478 = vmul.f32 %v477, 1.442695
    %v479 = vpow.pop %v478
    %v480 = vadd.f32 %v479, 1.0
    %v481 = vrcp.pop %v480
    %v482 = vmul.f32 1.0, %v481
    %v483 = vtanh.pop %v476
    %v484 = vmul.f32 %v482, %v383
    %486 = vrot.lane.b32.xlu0 %v483, 64
    %v487 = vpop.permute.xlu0 %486
    %v489 = vmul.f32 %v482, %v487
    %491 = vrot.lane.b32.xlu0 %v489, 32
    %v492 = vpop.permute.xlu0 %491
    %v494 = vadd.f32 %v484, %v492
    %v495 = vtanh.pop %v494
    %497 = vrot.lane.b32.xlu0 %v495, 64
    %v498 = vpop.permute.xlu0 %497
    %v500 = vmul.f32 %v482, %v498
    %502 = vrot.lane.b32.xlu0 %v500, 32
    %v503 = vpop.permute.xlu0 %502
    %505 = vst.msk [vmem:[#allocation4 + $0x1] sm:$0x1] %vm394, %v503
    %506 = vrot.lane.b32.xlu0 %v500, 16
    %v507 = vpop.permute.xlu0 %506
    %509 = vst.msk [vmem:[#allocation5 + $0x6] sm:$0x1] %vm394, %v507
    %v510 = vld [vmem:[#allocation2 + $0x2] sm:$0x1]
    %v511 = vld [vmem:[#allocation3 + $0x5] sm:$0x1]
    %v512 = vadd.f32 %v510, %v511
    %v513 = vsel %vm282, %v503, 0
    %515 = vmatprep.subr.mxu0 0.0
    %516 = vmatpush1.msra.mxu0 %v272
    %517 = vmatprep.subr.mxu0 0.0
    %518 = vmatpush1.msra.mxu0 %v273
    %519 = vmatprep.subr.mxu0 0.0
    %520 = vmatpush1.msra.mxu0 %v274
    %521 = vmatprep.subr.mxu0 0.0
    %522 = vmatpush1.msra.mxu0 %v275
    %523 = vmatprep.subr.mxu0 0.0
    %524 = vmatpush1.msra.mxu0 0.0
    %525 = vmatprep.subr.mxu0 0.0
    %526 = vmatpush1.msra.mxu0 0.0
    %527 = vmatprep.subr.mxu0 0.0
    %528 = vmatpush1.msra.mxu0 0.0
    %529 = vmatprep.subr.mxu0 0.0
    %530 = vmatpush1.msra.mxu0 0.0
    %531 = vmatprep.subr.mxu0 0.0
    %532 = vmatpush1.msra.mxu0 0.0
    %533 = vmatprep.subr.mxu0 0.0
    %534 = vmatpush1.msra.mxu0 0.0
    %535 = vmatprep.subr.mxu0 0.0
    %536 = vmatpush1.msra.mxu0 0.0
    %537 = vmatprep.subr.mxu0 0.0
    %538 = vmatpush1.msra.mxu0 0.0
    %539 = vmatprep.subr.mxu0 0.0
    %540 = vmatpush1.msra.mxu0 0.0
    %541 = vmatprep.subr.mxu0 0.0
    %542 = vmatpush1.msra.mxu0 0.0
    %543 = vmatprep.subr.mxu0 0.0
    %544 = vmatpush1.msra.mxu0 0.0
    %545 = vmatprep.subr.mxu0 0.0
    %546 = vmatpush1.msra.mxu0 0.0
    %547 = vmatprep.subr.mxu0 0.0
    %548 = vmatpush1.msra.mxu0 0.0
    %549 = vmatprep.subr.mxu0 0.0
    %550 = vmatpush1.msra.mxu0 0.0
    %551 = vmatprep.subr.mxu0 0.0
    %552 = vmatpush1.msra.mxu0 0.0
    %553 = vmatprep.subr.mxu0 0.0
    %554 = vmatpush1.msra.mxu0 0.0
    %555 = vmatprep.subr.mxu0 0.0
    %556 = vmatpush1.msra.mxu0 0.0
    %557 = vmatprep.subr.mxu0 0.0
    %558 = vmatpush1.msra.mxu0 0.0
    %559 = vmatprep.subr.mxu0 0.0
    %560 = vmatpush1.msra.mxu0 0.0
    %561 = vmatprep.subr.mxu0 0.0
    %562 = vmatpush1.msra.mxu0 0.0
    %563 = vmatprep.subr.mxu0 0.0
    %564 = vmatpush1.msra.mxu0 0.0
    %565 = vmatprep.subr.mxu0 0.0
    %566 = vmatpush1.msra.mxu0 0.0
    %567 = vmatprep.subr.mxu0 0.0
    %568 = vmatpush1.msra.mxu0 0.0
    %569 = vmatprep.subr.mxu0 0.0
    %570 = vmatpush1.msra.mxu0 0.0
    %571 = vmatprep.subr.mxu0 0.0
    %572 = vmatpush1.msra.mxu0 0.0
    %573 = vmatprep.subr.mxu0 0.0
    %574 = vmatpush1.msra.mxu0 0.0
    %575 = vmatprep.subr.mxu0 0.0
    %576 = vmatpush1.msra.mxu0 0.0
    %577 = vmatprep.subr.mxu0 0.0
    %578 = vmatpush1.msra.mxu0 0.0
    %579 = vmatprep.mubr.f32.mxu0 0.0
    %580 = vmatmul.mubr.f32.gmra.mrb[0].mxu0 %v513
    %v581 = vpop.f32.mrb[0].mxu0
    %v582 = vadd.f32 0.0, %v581
    %v583 = vpop.f32.mrb[0].mxu0
    %584 = vdwg.mxu0
    %v585 = vadd.f32 %v512, %v582
    %v586 = vadd.f32 %v585, %v276
    %v587 = vxor.u32 %v586, 2147483648
    %v588 = vmul.f32 %v587, 1.442695
    %v589 = vpow.pop %v588
    %v590 = vadd.f32 %v589, 1.0
    %v591 = vrcp.pop %v590
    %v592 = vmul.f32 1.0, %v591
    %v593 = vtanh.pop %v586
    %v594 = vmul.f32 %v592, %v494
    %596 = vrot.lane.b32.xlu0 %v593, 64
    %v597 = vpop.permute.xlu0 %596
    %v599 = vmul.f32 %v592, %v597
    %601 = vrot.lane.b32.xlu0 %v599, 32
    %v602 = vpop.permute.xlu0 %601
    %v604 = vadd.f32 %v594, %v602
    %v605 = vtanh.pop %v604
    %607 = vrot.lane.b32.xlu0 %v605, 64
    %v608 = vpop.permute.xlu0 %607
    %v610 = vmul.f32 %v592, %v608
    %612 = vrot.lane.b32.xlu0 %v610, 32
    %v613 = vpop.permute.xlu0 %612
    %615 = vst.msk [vmem:[#allocation4 + $0x2] sm:$0x1] %vm394, %v613
    %616 = vrot.lane.b32.xlu0 %v610, 16
    %v617 = vpop.permute.xlu0 %616
    %619 = vst.msk [vmem:[#allocation5 + $0x5] sm:$0x1] %vm394, %v617
    %v620 = vld [vmem:[#allocation2 + $0x3] sm:$0x1]
    %v621 = vld [vmem:[#allocation3 + $0x4] sm:$0x1]
    %v622 = vadd.f32 %v620, %v621
    %v623 = vsel %vm282, %v613, 0
    %625 = vmatprep.subr.mxu0 0.0
    %626 = vmatpush1.msra.mxu0 %v272
    %627 = vmatprep.subr.mxu0 0.0
    %628 = vmatpush1.msra.mxu0 %v273
    %629 = vmatprep.subr.mxu0 0.0
    %630 = vmatpush1.msra.mxu0 %v274
    %631 = vmatprep.subr.mxu0 0.0
    %632 = vmatpush1.msra.mxu0 %v275
    %633 = vmatprep.subr.mxu0 0.0
    %634 = vmatpush1.msra.mxu0 0.0
    %635 = vmatprep.subr.mxu0 0.0
    %636 = vmatpush1.msra.mxu0 0.0
    %637 = vmatprep.subr.mxu0 0.0
    %638 = vmatpush1.msra.mxu0 0.0
    %639 = vmatprep.subr.mxu0 0.0
    %640 = vmatpush1.msra.mxu0 0.0
    %641 = vmatprep.subr.mxu0 0.0
    %642 = vmatpush1.msra.mxu0 0.0
    %643 = vmatprep.subr.mxu0 0.0
    %644 = vmatpush1.msra.mxu0 0.0
    %645 = vmatprep.subr.mxu0 0.0
    %646 = vmatpush1.msra.mxu0 0.0
    %647 = vmatprep.subr.mxu0 0.0
    %648 = vmatpush1.msra.mxu0 0.0
    %649 = vmatprep.subr.mxu0 0.0
    %650 = vmatpush1.msra.mxu0 0.0
    %651 = vmatprep.subr.mxu0 0.0
    %652 = vmatpush1.msra.mxu0 0.0
    %653 = vmatprep.subr.mxu0 0.0
    %654 = vmatpush1.msra.mxu0 0.0
    %655 = vmatprep.subr.mxu0 0.0
    %656 = vmatpush1.msra.mxu0 0.0
    %657 = vmatprep.subr.mxu0 0.0
    %658 = vmatpush1.msra.mxu0 0.0
    %659 = vmatprep.subr.mxu0 0.0
    %660 = vmatpush1.msra.mxu0 0.0
    %661 = vmatprep.subr.mxu0 0.0
    %662 = vmatpush1.msra.mxu0 0.0
    %663 = vmatprep.subr.mxu0 0.0
    %664 = vmatpush1.msra.mxu0 0.0
    %665 = vmatprep.subr.mxu0 0.0
    %666 = vmatpush1.msra.mxu0 0.0
    %667 = vmatprep.subr.mxu0 0.0
    %668 = vmatpush1.msra.mxu0 0.0
    %669 = vmatprep.subr.mxu0 0.0
    %670 = vmatpush1.msra.mxu0 0.0
    %671 = vmatprep.subr.mxu0 0.0
    %672 = vmatpush1.msra.mxu0 0.0
    %673 = vmatprep.subr.mxu0 0.0
    %674 = vmatpush1.msra.mxu0 0.0
    %675 = vmatprep.subr.mxu0 0.0
    %676 = vmatpush1.msra.mxu0 0.0
    %677 = vmatprep.subr.mxu0 0.0
    %678 = vmatpush1.msra.mxu0 0.0
    %679 = vmatprep.subr.mxu0 0.0
    %680 = vmatpush1.msra.mxu0 0.0
    %681 = vmatprep.subr.mxu0 0.0
    %682 = vmatpush1.msra.mxu0 0.0
    %683 = vmatprep.subr.mxu0 0.0
    %684 = vmatpush1.msra.mxu0 0.0
    %685 = vmatprep.subr.mxu0 0.0
    %686 = vmatpush1.msra.mxu0 0.0
    %687 = vmatprep.subr.mxu0 0.0
    %688 = vmatpush1.msra.mxu0 0.0
    %689 = vmatprep.mubr.f32.mxu0 0.0
    %690 = vmatmul.mubr.f32.gmra.mrb[0].mxu0 %v623
    %v691 = vpop.f32.mrb[0].mxu0
    %v692 = vadd.f32 0.0, %v691
    %v693 = vpop.f32.mrb[0].mxu0
    %694 = vdwg.mxu0
    %v695 = vadd.f32 %v622, %v692
    %v696 = vadd.f32 %v695, %v276
    %v697 = vxor.u32 %v696, 2147483648
    %v698 = vmul.f32 %v697, 1.442695
    %v699 = vpow.pop %v698
    %v700 = vadd.f32 %v699, 1.0
    %v701 = vrcp.pop %v700
    %v702 = vmul.f32 1.0, %v701
    %v703 = vtanh.pop %v696
    %v704 = vmul.f32 %v702, %v604
    %706 = vrot.lane.b32.xlu0 %v703, 64
    %v707 = vpop.permute.xlu0 %706
    %v709 = vmul.f32 %v702, %v707
    %711 = vrot.lane.b32.xlu0 %v709, 32
    %v712 = vpop.permute.xlu0 %711
    %v714 = vadd.f32 %v704, %v712
    %v715 = vtanh.pop %v714
    %717 = vrot.lane.b32.xlu0 %v715, 64
    %v718 = vpop.permute.xlu0 %717
    %v720 = vmul.f32 %v702, %v718
    %722 = vrot.lane.b32.xlu0 %v720, 32
    %v723 = vpop.permute.xlu0 %722
    %725 = vst.msk [vmem:[#allocation4 + $0x3] sm:$0x1] %vm394, %v723
    %726 = vrot.lane.b32.xlu0 %v720, 16
    %v727 = vpop.permute.xlu0 %726
    %729 = vst.msk [vmem:[#allocation5 + $0x4] sm:$0x1] %vm394, %v727
    %v730 = vld [vmem:[#allocation2 + $0x4] sm:$0x1]
    %v731 = vld [vmem:[#allocation3 + $0x3] sm:$0x1]
    %v732 = vadd.f32 %v730, %v731
    %v733 = vsel %vm282, %v723, 0
    %735 = vmatprep.subr.mxu0 0.0
    %736 = vmatpush1.msra.mxu0 %v272
    %737 = vmatprep.subr.mxu0 0.0
    %738 = vmatpush1.msra.mxu0 %v273
    %739 = vmatprep.subr.mxu0 0.0
    %740 = vmatpush1.msra.mxu0 %v274
    %741 = vmatprep.subr.mxu0 0.0
    %742 = vmatpush1.msra.mxu0 %v275
    %743 = vmatprep.subr.mxu0 0.0
    %744 = vmatpush1.msra.mxu0 0.0
    %745 = vmatprep.subr.mxu0 0.0
    %746 = vmatpush1.msra.mxu0 0.0
    %747 = vmatprep.subr.mxu0 0.0
    %748 = vmatpush1.msra.mxu0 0.0
    %749 = vmatprep.subr.mxu0 0.0
    %750 = vmatpush1.msra.mxu0 0.0
    %751 = vmatprep.subr.mxu0 0.0
    %752 = vmatpush1.msra.mxu0 0.0
    %753 = vmatprep.subr.mxu0 0.0
    %754 = vmatpush1.msra.mxu0 0.0
    %755 = vmatprep.subr.mxu0 0.0
    %756 = vmatpush1.msra.mxu0 0.0
    %757 = vmatprep.subr.mxu0 0.0
    %758 = vmatpush1.msra.mxu0 0.0
    %759 = vmatprep.subr.mxu0 0.0
    %760 = vmatpush1.msra.mxu0 0.0
    %761 = vmatprep.subr.mxu0 0.0
    %762 = vmatpush1.msra.mxu0 0.0
    %763 = vmatprep.subr.mxu0 0.0
    %764 = vmatpush1.msra.mxu0 0.0
    %765 = vmatprep.subr.mxu0 0.0
    %766 = vmatpush1.msra.mxu0 0.0
    %767 = vmatprep.subr.mxu0 0.0
    %768 = vmatpush1.msra.mxu0 0.0
    %769 = vmatprep.subr.mxu0 0.0
    %770 = vmatpush1.msra.mxu0 0.0
    %771 = vmatprep.subr.mxu0 0.0
    %772 = vmatpush1.msra.mxu0 0.0
    %773 = vmatprep.subr.mxu0 0.0
    %774 = vmatpush1.msra.mxu0 0.0
    %775 = vmatprep.subr.mxu0 0.0
    %776 = vmatpush1.msra.mxu0 0.0
    %777 = vmatprep.subr.mxu0 0.0
    %778 = vmatpush1.msra.mxu0 0.0
    %779 = vmatprep.subr.mxu0 0.0
    %780 = vmatpush1.msra.mxu0 0.0
    %781 = vmatprep.subr.mxu0 0.0
    %782 = vmatpush1.msra.mxu0 0.0
    %783 = vmatprep.subr.mxu0 0.0
    %784 = vmatpush1.msra.mxu0 0.0
    %785 = vmatprep.subr.mxu0 0.0
    %786 = vmatpush1.msra.mxu0 0.0
    %787 = vmatprep.subr.mxu0 0.0
    %788 = vmatpush1.msra.mxu0 0.0
    %789 = vmatprep.subr.mxu0 0.0
    %790 = vmatpush1.msra.mxu0 0.0
    %791 = vmatprep.subr.mxu0 0.0
    %792 = vmatpush1.msra.mxu0 0.0
    %793 = vmatprep.subr.mxu0 0.0
    %794 = vmatpush1.msra.mxu0 0.0
    %795 = vmatprep.subr.mxu0 0.0
    %796 = vmatpush1.msra.mxu0 0.0
    %797 = vmatprep.subr.mxu0 0.0
    %798 = vmatpush1.msra.mxu0 0.0
    %799 = vmatprep.mubr.f32.mxu0 0.0
    %800 = vmatmul.mubr.f32.gmra.mrb[0].mxu0 %v733
    %v801 = vpop.f32.mrb[0].mxu0
    %v802 = vadd.f32 0.0, %v801
    %v803 = vpop.f32.mrb[0].mxu0
    %804 = vdwg.mxu0
    %v805 = vadd.f32 %v732, %v802
    %v806 = vadd.f32 %v805, %v276
    %v807 = vxor.u32 %v806, 2147483648
    %v808 = vmul.f32 %v807, 1.442695
    %v809 = vpow.pop %v808
    %v810 = vadd.f32 %v809, 1.0
    %v811 = vrcp.pop %v810
    %v812 = vmul.f32 1.0, %v811
    %v813 = vtanh.pop %v806
    %v814 = vmul.f32 %v812, %v714
    %816 = vrot.lane.b32.xlu0 %v813, 64
    %v817 = vpop.permute.xlu0 %816
    %v819 = vmul.f32 %v812, %v817
    %821 = vrot.lane.b32.xlu0 %v819, 32
    %v822 = vpop.permute.xlu0 %821
    %v824 = vadd.f32 %v814, %v822
    %v825 = vtanh.pop %v824
    %827 = vrot.lane.b32.xlu0 %v825, 64
    %v828 = vpop.permute.xlu0 %827
    %v830 = vmul.f32 %v812, %v828
    %832 = vrot.lane.b32.xlu0 %v830, 32
    %v833 = vpop.permute.xlu0 %832
    %835 = vst.msk [vmem:[#allocation4 + $0x4] sm:$0x1] %vm394, %v833
    %836 = vrot.lane.b32.xlu0 %v830, 16
    %v837 = vpop.permute.xlu0 %836
    %839 = vst.msk [vmem:[#allocation5 + $0x3] sm:$0x1] %vm394, %v837
    %v840 = vld [vmem:[#allocation2 + $0x5] sm:$0x1]
    %v841 = vld [vmem:[#allocation3 + $0x2] sm:$0x1]
    %v842 = vadd.f32 %v840, %v841
    %v843 = vsel %vm282, %v833, 0
    %845 = vmatprep.subr.mxu0 0.0
    %846 = vmatpush1.msra.mxu0 %v272
    %847 = vmatprep.subr.mxu0 0.0
    %848 = vmatpush1.msra.mxu0 %v273
    %849 = vmatprep.subr.mxu0 0.0
    %850 = vmatpush1.msra.mxu0 %v274
    %851 = vmatprep.subr.mxu0 0.0
    %852 = vmatpush1.msra.mxu0 %v275
    %853 = vmatprep.subr.mxu0 0.0
    %854 = vmatpush1.msra.mxu0 0.0
    %855 = vmatprep.subr.mxu0 0.0
    %856 = vmatpush1.msra.mxu0 0.0
    %857 = vmatprep.subr.mxu0 0.0
    %858 = vmatpush1.msra.mxu0 0.0
    %859 = vmatprep.subr.mxu0 0.0
    %860 = vmatpush1.msra.mxu0 0.0
    %861 = vmatprep.subr.mxu0 0.0
    %862 = vmatpush1.msra.mxu0 0.0
    %863 = vmatprep.subr.mxu0 0.0
    %864 = vmatpush1.msra.mxu0 0.0
    %865 = vmatprep.subr.mxu0 0.0
    %866 = vmatpush1.msra.mxu0 0.0
    %867 = vmatprep.subr.mxu0 0.0
    %868 = vmatpush1.msra.mxu0 0.0
    %869 = vmatprep.subr.mxu0 0.0
    %870 = vmatpush1.msra.mxu0 0.0
    %871 = vmatprep.subr.mxu0 0.0
    %872 = vmatpush1.msra.mxu0 0.0
    %873 = vmatprep.subr.mxu0 0.0
    %874 = vmatpush1.msra.mxu0 0.0
    %875 = vmatprep.subr.mxu0 0.0
    %876 = vmatpush1.msra.mxu0 0.0
    %877 = vmatprep.subr.mxu0 0.0
    %878 = vmatpush1.msra.mxu0 0.0
    %879 = vmatprep.subr.mxu0 0.0
    %880 = vmatpush1.msra.mxu0 0.0
    %881 = vmatprep.subr.mxu0 0.0
    %882 = vmatpush1.msra.mxu0 0.0
    %883 = vmatprep.subr.mxu0 0.0
    %884 = vmatpush1.msra.mxu0 0.0
    %885 = vmatprep.subr.mxu0 0.0
    %886 = vmatpush1.msra.mxu0 0.0
    %887 = vmatprep.subr.mxu0 0.0
    %888 = vmatpush1.msra.mxu0 0.0
    %889 = vmatprep.subr.mxu0 0.0
    %890 = vmatpush1.msra.mxu0 0.0
    %891 = vmatprep.subr.mxu0 0.0
    %892 = vmatpush1.msra.mxu0 0.0
    %893 = vmatprep.subr.mxu0 0.0
    %894 = vmatpush1.msra.mxu0 0.0
    %895 = vmatprep.subr.mxu0 0.0
    %896 = vmatpush1.msra.mxu0 0.0
    %897 = vmatprep.subr.mxu0 0.0
    %898 = vmatpush1.msra.mxu0 0.0
    %899 = vmatprep.subr.mxu0 0.0
    %900 = vmatpush1.msra.mxu0 0.0
    %901 = vmatprep.subr.mxu0 0.0
    %902 = vmatpush1.msra.mxu0 0.0
    %903 = vmatprep.subr.mxu0 0.0
    %904 = vmatpush1.msra.mxu0 0.0
    %905 = vmatprep.subr.mxu0 0.0
    %906 = vmatpush1.msra.mxu0 0.0
    %907 = vmatprep.subr.mxu0 0.0
    %908 = vmatpush1.msra.mxu0 0.0
    %909 = vmatprep.mubr.f32.mxu0 0.0
    %910 = vmatmul.mubr.f32.gmra.mrb[0].mxu0 %v843
    %v911 = vpop.f32.mrb[0].mxu0
    %v912 = vadd.f32 0.0, %v911
    %v913 = vpop.f32.mrb[0].mxu0
    %914 = vdwg.mxu0
    %v915 = vadd.f32 %v842, %v912
    %v916 = vadd.f32 %v915, %v276
    %v917 = vxor.u32 %v916, 2147483648
    %v918 = vmul.f32 %v917, 1.442695
    %v919 = vpow.pop %v918
    %v920 = vadd.f32 %v919, 1.0
    %v921 = vrcp.pop %v920
    %v922 = vmul.f32 1.0, %v921
    %v923 = vtanh.pop %v916
    %v924 = vmul.f32 %v922, %v824
    %926 = vrot.lane.b32.xlu0 %v923, 64
    %v927 = vpop.permute.xlu0 %926
    %v929 = vmul.f32 %v922, %v927
    %931 = vrot.lane.b32.xlu0 %v929, 32
    %v932 = vpop.permute.xlu0 %931
    %v934 = vadd.f32 %v924, %v932
    %v935 = vtanh.pop %v934
    %937 = vrot.lane.b32.xlu0 %v935, 64
    %v938 = vpop.permute.xlu0 %937
    %v940 = vmul.f32 %v922, %v938
    %942 = vrot.lane.b32.xlu0 %v940, 32
    %v943 = vpop.permute.xlu0 %942
    %945 = vst.msk [vmem:[#allocation4 + $0x5] sm:$0x1] %vm394, %v943
    %946 = vrot.lane.b32.xlu0 %v940, 16
    %v947 = vpop.permute.xlu0 %946
    %949 = vst.msk [vmem:[#allocation5 + $0x2] sm:$0x1] %vm394, %v947
    %v950 = vld [vmem:[#allocation2 + $0x6] sm:$0x1]
    %v951 = vld [vmem:[#allocation3 + $0x1] sm:$0x1]
    %v952 = vadd.f32 %v950, %v951
    %v953 = vsel %vm282, %v943, 0
    %955 = vmatprep.subr.mxu0 0.0
    %956 = vmatpush1.msra.mxu0 %v272
    %957 = vmatprep.subr.mxu0 0.0
    %958 = vmatpush1.msra.mxu0 %v273
    %959 = vmatprep.subr.mxu0 0.0
    %960 = vmatpush1.msra.mxu0 %v274
    %961 = vmatprep.subr.mxu0 0.0
    %962 = vmatpush1.msra.mxu0 %v275
    %963 = vmatprep.subr.mxu0 0.0
    %964 = vmatpush1.msra.mxu0 0.0
    %965 = vmatprep.subr.mxu0 0.0
    %966 = vmatpush1.msra.mxu0 0.0
    %967 = vmatprep.subr.mxu0 0.0
    %968 = vmatpush1.msra.mxu0 0.0
    %969 = vmatprep.subr.mxu0 0.0
    %970 = vmatpush1.msra.mxu0 0.0
    %971 = vmatprep.subr.mxu0 0.0
    %972 = vmatpush1.msra.mxu0 0.0
    %973 = vmatprep.subr.mxu0 0.0
    %974 = vmatpush1.msra.mxu0 0.0
    %975 = vmatprep.subr.mxu0 0.0
    %976 = vmatpush1.msra.mxu0 0.0
    %977 = vmatprep.subr.mxu0 0.0
    %978 = vmatpush1.msra.mxu0 0.0
    %979 = vmatprep.subr.mxu0 0.0
    %980 = vmatpush1.msra.mxu0 0.0
    %981 = vmatprep.subr.mxu0 0.0
    %982 = vmatpush1.msra.mxu0 0.0
    %983 = vmatprep.subr.mxu0 0.0
    %984 = vmatpush1.msra.mxu0 0.0
    %985 = vmatprep.subr.mxu0 0.0
    %986 = vmatpush1.msra.mxu0 0.0
    %987 = vmatprep.subr.mxu0 0.0
    %988 = vmatpush1.msra.mxu0 0.0
    %989 = vmatprep.subr.mxu0 0.0
    %990 = vmatpush1.msra.mxu0 0.0
    %991 = vmatprep.subr.mxu0 0.0
    %992 = vmatpush1.msra.mxu0 0.0
    %993 = vmatprep.subr.mxu0 0.0
    %994 = vmatpush1.msra.mxu0 0.0
    %995 = vmatprep.subr.mxu0 0.0
    %996 = vmatpush1.msra.mxu0 0.0
    %997 = vmatprep.subr.mxu0 0.0
    %998 = vmatpush1.msra.mxu0 0.0
    %999 = vmatprep.subr.mxu0 0.0
    %1000 = vmatpush1.msra.mxu0 0.0
    %1001 = vmatprep.subr.mxu0 0.0
    %1002 = vmatpush1.msra.mxu0 0.0
    %1003 = vmatprep.subr.mxu0 0.0
    %1004 = vmatpush1.msra.mxu0 0.0
    %1005 = vmatprep.subr.mxu0 0.0
    %1006 = vmatpush1.msra.mxu0 0.0
    %1007 = vmatprep.subr.mxu0 0.0
    %1008 = vmatpush1.msra.mxu0 0.0
    %1009 = vmatprep.subr.mxu0 0.0
    %1010 = vmatpush1.msra.mxu0 0.0
    %1011 = vmatprep.subr.mxu0 0.0
    %1012 = vmatpush1.msra.mxu0 0.0
    %1013 = vmatprep.subr.mxu0 0.0
    %1014 = vmatpush1.msra.mxu0 0.0
    %1015 = vmatprep.subr.mxu0 0.0
    %1016 = vmatpush1.msra.mxu0 0.0
    %1017 = vmatprep.subr.mxu0 0.0
    %1018 = vmatpush1.msra.mxu0 0.0
    %1019 = vmatprep.mubr.f32.mxu0 0.0
    %1020 = vmatmul.mubr.f32.gmra.mrb[0].mxu0 %v953
    %v1021 = vpop.f32.mrb[0].mxu0
    %v1022 = vadd.f32 0.0, %v1021
    %v1023 = vpop.f32.mrb[0].mxu0
    %1024 = vdwg.mxu0
    %v1025 = vadd.f32 %v952, %v1022
    %v1026 = vadd.f32 %v1025, %v276
    %v1027 = vxor.u32 %v1026, 2147483648
    %v1028 = vmul.f32 %v1027, 1.442695
    %v1029 = vpow.pop %v1028
    %v1030 = vadd.f32 %v1029, 1.0
    %v1031 = vrcp.pop %v1030
    %v1032 = vmul.f32 1.0, %v1031
    %v1033 = vtanh.pop %v1026
    %v1034 = vmul.f32 %v1032, %v934
    %1036 = vrot.lane.b32.xlu0 %v1033, 64
    %v1037 = vpop.permute.xlu0 %1036
    %v1039 = vmul.f32 %v1032, %v1037
    %1041 = vrot.lane.b32.xlu0 %v1039, 32
    %v1042 = vpop.permute.xlu0 %1041
    %v1044 = vadd.f32 %v1034, %v1042
    %v1045 = vtanh.pop %v1044
    %1047 = vrot.lane.b32.xlu0 %v1045, 64
    %v1048 = vpop.permute.xlu0 %1047
    %v1050 = vmul.f32 %v1032, %v1048
    %1052 = vrot.lane.b32.xlu0 %v1050, 32
    %v1053 = vpop.permute.xlu0 %1052
    %1055 = vst.msk [vmem:[#allocation4 + $0x6] sm:$0x1] %vm394, %v1053
    %1056 = vrot.lane.b32.xlu0 %v1050, 16
    %v1057 = vpop.permute.xlu0 %1056
    %1059 = vst.msk [vmem:[#allocation5 + $0x1] sm:$0x1] %vm394, %v1057
    %v1060 = vld [vmem:[#allocation2 + $0x7] sm:$0x1]
    %v1061 = vld [vmem:[#allocation3] sm:$0x1]
    %v1062 = vadd.f32 %v1060, %v1061
    %v1063 = vsel %vm282, %v1053, 0
    %1065 = vmatprep.subr.mxu0 0.0
    %1066 = vmatpush1.msra.mxu0 %v272
    %1067 = vmatprep.subr.mxu0 0.0
    %1068 = vmatpush1.msra.mxu0 %v273
    %1069 = vmatprep.subr.mxu0 0.0
    %1070 = vmatpush1.msra.mxu0 %v274
    %1071 = vmatprep.subr.mxu0 0.0
    %1072 = vmatpush1.msra.mxu0 %v275
    %1073 = vmatprep.subr.mxu0 0.0
    %1074 = vmatpush1.msra.mxu0 0.0
    %1075 = vmatprep.subr.mxu0 0.0
    %1076 = vmatpush1.msra.mxu0 0.0
    %1077 = vmatprep.subr.mxu0 0.0
    %1078 = vmatpush1.msra.mxu0 0.0
    %1079 = vmatprep.subr.mxu0 0.0
    %1080 = vmatpush1.msra.mxu0 0.0
    %1081 = vmatprep.subr.mxu0 0.0
    %1082 = vmatpush1.msra.mxu0 0.0
    %1083 = vmatprep.subr.mxu0 0.0
    %1084 = vmatpush1.msra.mxu0 0.0
    %1085 = vmatprep.subr.mxu0 0.0
    %1086 = vmatpush1.msra.mxu0 0.0
    %1087 = vmatprep.subr.mxu0 0.0
    %1088 = vmatpush1.msra.mxu0 0.0
    %1089 = vmatprep.subr.mxu0 0.0
    %1090 = vmatpush1.msra.mxu0 0.0
    %1091 = vmatprep.subr.mxu0 0.0
    %1092 = vmatpush1.msra.mxu0 0.0
    %1093 = vmatprep.subr.mxu0 0.0
    %1094 = vmatpush1.msra.mxu0 0.0
    %1095 = vmatprep.subr.mxu0 0.0
    %1096 = vmatpush1.msra.mxu0 0.0
    %1097 = vmatprep.subr.mxu0 0.0
    %1098 = vmatpush1.msra.mxu0 0.0
    %1099 = vmatprep.subr.mxu0 0.0
    %1100 = vmatpush1.msra.mxu0 0.0
    %1101 = vmatprep.subr.mxu0 0.0
    %1102 = vmatpush1.msra.mxu0 0.0
    %1103 = vmatprep.subr.mxu0 0.0
    %1104 = vmatpush1.msra.mxu0 0.0
    %1105 = vmatprep.subr.mxu0 0.0
    %1106 = vmatpush1.msra.mxu0 0.0
    %1107 = vmatprep.subr.mxu0 0.0
    %1108 = vmatpush1.msra.mxu0 0.0
    %1109 = vmatprep.subr.mxu0 0.0
    %1110 = vmatpush1.msra.mxu0 0.0
    %1111 = vmatprep.subr.mxu0 0.0
    %1112 = vmatpush1.msra.mxu0 0.0
    %1113 = vmatprep.subr.mxu0 0.0
    %1114 = vmatpush1.msra.mxu0 0.0
    %1115 = vmatprep.subr.mxu0 0.0
    %1116 = vmatpush1.msra.mxu0 0.0
    %1117 = vmatprep.subr.mxu0 0.0
    %1118 = vmatpush1.msra.mxu0 0.0
    %1119 = vmatprep.subr.mxu0 0.0
    %1120 = vmatpush1.msra.mxu0 0.0
    %1121 = vmatprep.subr.mxu0 0.0
    %1122 = vmatpush1.msra.mxu0 0.0
    %1123 = vmatprep.subr.mxu0 0.0
    %1124 = vmatpush1.msra.mxu0 0.0
    %1125 = vmatprep.subr.mxu0 0.0
    %1126 = vmatpush1.msra.mxu0 0.0
    %1127 = vmatprep.subr.mxu0 0.0
    %1128 = vmatpush1.msra.mxu0 0.0
    %1129 = vmatprep.mubr.f32.mxu0 0.0
    %1130 = vmatmul.mubr.f32.gmra.mrb[0].mxu0 %v1063
    %v1131 = vpop.f32.mrb[0].mxu0
    %v1132 = vadd.f32 0.0, %v1131
    %v1133 = vpop.f32.mrb[0].mxu0
    %1134 = vdwg.mxu0
    %v1135 = vadd.f32 %v1062, %v1132
    %v1136 = vadd.f32 %v1135, %v276
    %v1137 = vxor.u32 %v1136, 2147483648
    %v1138 = vmul.f32 %v1137, 1.442695
    %v1139 = vpow.pop %v1138
    %v1140 = vadd.f32 %v1139, 1.0
    %v1141 = vrcp.pop %v1140
    %v1142 = vmul.f32 1.0, %v1141
    %v1143 = vtanh.pop %v1136
    %v1144 = vmul.f32 %v1142, %v1044
    %1146 = vrot.lane.b32.xlu0 %v1143, 64
    %v1147 = vpop.permute.xlu0 %1146
    %v1149 = vmul.f32 %v1142, %v1147
    %1151 = vrot.lane.b32.xlu0 %v1149, 32
    %v1152 = vpop.permute.xlu0 %1151
    %v1154 = vadd.f32 %v1144, %v1152
    %v1155 = vtanh.pop %v1154
    %1157 = vrot.lane.b32.xlu0 %v1155, 64
    %v1158 = vpop.permute.xlu0 %1157
    %v1160 = vmul.f32 %v1142, %v1158
    %1162 = vrot.lane.b32.xlu0 %v1160, 32
    %v1163 = vpop.permute.xlu0 %1162
    %1165 = vst.msk [vmem:[#allocation4 + $0x7] sm:$0x1] %vm394, %v1163
    %1166 = vrot.lane.b32.xlu0 %v1160, 16
    %v1167 = vpop.permute.xlu0 %1166
    %1169 = vst.msk [vmem:[#allocation5] sm:$0x1] %vm394, %v1167
    %v1170 = vld [vmem:[#allocation4] sm:$0xff]
    %v1171 = vld [vmem:[%s7] sm:$0xff]
    %v1172 = vld [vmem:[%s7 + $0x8] sm:$0xff]
    %v1173 = vld [vmem:[#allocation5] sm:$0xff]
    %v1174 = vld [vmem:[#allocation17] sm:$0xff]
    %v1175 = vld [vmem:[#allocation17 + $0x8] sm:$0xff]
    %v1177 = vsel %vm124, %v1173, 0
    %1179 = vmatprep.subr.mxu0 0.0
    %1180 = vmatpush1.msra.mxu0 %v1174
    %1181 = vmatprep.subr.mxu0 0.0
    %1182 = vmatpush1.msra.mxu0 %v1175
    %1183 = vmatprep.subr.mxu0 0.0
    %1184 = vmatpush1.msra.mxu0 0.0
    %1185 = vmatprep.subr.mxu0 0.0
    %1186 = vmatpush1.msra.mxu0 0.0
    %1187 = vmatprep.subr.mxu0 0.0
    %1188 = vmatpush1.msra.mxu0 0.0
    %1189 = vmatprep.subr.mxu0 0.0
    %1190 = vmatpush1.msra.mxu0 0.0
    %1191 = vmatprep.subr.mxu0 0.0
    %1192 = vmatpush1.msra.mxu0 0.0
    %1193 = vmatprep.subr.mxu0 0.0
    %1194 = vmatpush1.msra.mxu0 0.0
    %1195 = vmatprep.subr.mxu0 0.0
    %1196 = vmatpush1.msra.mxu0 0.0
    %1197 = vmatprep.subr.mxu0 0.0
    %1198 = vmatpush1.msra.mxu0 0.0
    %1199 = vmatprep.subr.mxu0 0.0
    %1200 = vmatpush1.msra.mxu0 0.0
    %1201 = vmatprep.subr.mxu0 0.0
    %1202 = vmatpush1.msra.mxu0 0.0
    %1203 = vmatprep.subr.mxu0 0.0
    %1204 = vmatpush1.msra.mxu0 0.0
    %1205 = vmatprep.subr.mxu0 0.0
    %1206 = vmatpush1.msra.mxu0 0.0
    %1207 = vmatprep.subr.mxu0 0.0
    %1208 = vmatpush1.msra.mxu0 0.0
    %1209 = vmatprep.subr.mxu0 0.0
    %1210 = vmatpush1.msra.mxu0 0.0
    %1211 = vmatprep.subr.mxu0 0.0
    %1212 = vmatpush1.msra.mxu0 0.0
    %1213 = vmatprep.subr.mxu0 0.0
    %1214 = vmatpush1.msra.mxu0 0.0
    %1215 = vmatprep.subr.mxu0 0.0
    %1216 = vmatpush1.msra.mxu0 0.0
    %1217 = vmatprep.subr.mxu0 0.0
    %1218 = vmatpush1.msra.mxu0 0.0
    %1219 = vmatprep.subr.mxu0 0.0
    %1220 = vmatpush1.msra.mxu0 0.0
    %1221 = vmatprep.subr.mxu0 0.0
    %1222 = vmatpush1.msra.mxu0 0.0
    %1223 = vmatprep.subr.mxu0 0.0
    %1224 = vmatpush1.msra.mxu0 0.0
    %1225 = vmatprep.subr.mxu0 0.0
    %1226 = vmatpush1.msra.mxu0 0.0
    %1227 = vmatprep.subr.mxu0 0.0
    %1228 = vmatpush1.msra.mxu0 0.0
    %1229 = vmatprep.subr.mxu0 0.0
    %1230 = vmatpush1.msra.mxu0 0.0
    %1231 = vmatprep.subr.mxu0 0.0
    %1232 = vmatpush1.msra.mxu0 0.0
    %1233 = vmatprep.subr.mxu0 0.0
    %1234 = vmatpush1.msra.mxu0 0.0
    %1235 = vmatprep.subr.mxu0 0.0
    %1236 = vmatpush1.msra.mxu0 0.0
    %1237 = vmatprep.subr.mxu0 0.0
    %1238 = vmatpush1.msra.mxu0 0.0
    %1239 = vmatprep.subr.mxu0 0.0
    %1240 = vmatpush1.msra.mxu0 0.0
    %1241 = vmatprep.subr.mxu0 0.0
    %1242 = vmatpush1.msra.mxu0 0.0
    %1243 = vmatprep.mubr.f32.mxu0 0.0
    %1244 = vmatmul.mubr.f32.gmra.mrb[0].mxu0 %v1177
    %v1245 = vpop.f32.mrb[0].mxu0
    %v1246 = vadd.f32 0.0, %v1245
    %v1247 = vpop.f32.mrb[0].mxu0
    %1248 = vdwg.mxu0
    %v1250 = vsel %vm124, %v1170, 0
    %1252 = vmatprep.subr.mxu0 0.0
    %1253 = vmatpush1.msra.mxu0 %v1171
    %1254 = vmatprep.subr.mxu0 0.0
    %1255 = vmatpush1.msra.mxu0 %v1172
    %1256 = vmatprep.subr.mxu0 0.0
    %1257 = vmatpush1.msra.mxu0 0.0
    %1258 = vmatprep.subr.mxu0 0.0
    %1259 = vmatpush1.msra.mxu0 0.0
    %1260 = vmatprep.subr.mxu0 0.0
    %1261 = vmatpush1.msra.mxu0 0.0
    %1262 = vmatprep.subr.mxu0 0.0
    %1263 = vmatpush1.msra.mxu0 0.0
    %1264 = vmatprep.subr.mxu0 0.0
    %1265 = vmatpush1.msra.mxu0 0.0
    %1266 = vmatprep.subr.mxu0 0.0
    %1267 = vmatpush1.msra.mxu0 0.0
    %1268 = vmatprep.subr.mxu0 0.0
    %1269 = vmatpush1.msra.mxu0 0.0
    %1270 = vmatprep.subr.mxu0 0.0
    %1271 = vmatpush1.msra.mxu0 0.0
    %1272 = vmatprep.subr.mxu0 0.0
    %1273 = vmatpush1.msra.mxu0 0.0
    %1274 = vmatprep.subr.mxu0 0.0
    %1275 = vmatpush1.msra.mxu0 0.0
    %1276 = vmatprep.subr.mxu0 0.0
    %1277 = vmatpush1.msra.mxu0 0.0
    %1278 = vmatprep.subr.mxu0 0.0
    %1279 = vmatpush1.msra.mxu0 0.0
    %1280 = vmatprep.subr.mxu0 0.0
    %1281 = vmatpush1.msra.mxu0 0.0
    %1282 = vmatprep.subr.mxu0 0.0
    %1283 = vmatpush1.msra.mxu0 0.0
    %1284 = vmatprep.subr.mxu0 0.0
    %1285 = vmatpush1.msra.mxu0 0.0
    %1286 = vmatprep.subr.mxu0 0.0
    %1287 = vmatpush1.msra.mxu0 0.0
    %1288 = vmatprep.subr.mxu0 0.0
    %1289 = vmatpush1.msra.mxu0 0.0
    %1290 = vmatprep.subr.mxu0 0.0
    %1291 = vmatpush1.msra.mxu0 0.0
    %1292 = vmatprep.subr.mxu0 0.0
    %1293 = vmatpush1.msra.mxu0 0.0
    %1294 = vmatprep.subr.mxu0 0.0
    %1295 = vmatpush1.msra.mxu0 0.0
    %1296 = vmatprep.subr.mxu0 0.0
    %1297 = vmatpush1.msra.mxu0 0.0
    %1298 = vmatprep.subr.mxu0 0.0
    %1299 = vmatpush1.msra.mxu0 0.0
    %1300 = vmatprep.subr.mxu0 0.0
    %1301 = vmatpush1.msra.mxu0 0.0
    %1302 = vmatprep.subr.mxu0 0.0
    %1303 = vmatpush1.msra.mxu0 0.0
    %1304 = vmatprep.subr.mxu0 0.0
    %1305 = vmatpush1.msra.mxu0 0.0
    %1306 = vmatprep.subr.mxu0 0.0
    %1307 = vmatpush1.msra.mxu0 0.0
    %1308 = vmatprep.subr.mxu0 0.0
    %1309 = vmatpush1.msra.mxu0 0.0
    %1310 = vmatprep.subr.mxu0 0.0
    %1311 = vmatpush1.msra.mxu0 0.0
    %1312 = vmatprep.subr.mxu0 0.0
    %1313 = vmatpush1.msra.mxu0 0.0
    %1314 = vmatprep.subr.mxu0 0.0
    %1315 = vmatpush1.msra.mxu0 0.0
    %1316 = vmatprep.mubr.f32.mxu0 0.0
    %1317 = vmatmul.mubr.f32.gmra.mrb[0].mxu0 %v1250
    %v1318 = vpop.f32.mrb[0].mxu0
    %v1319 = vadd.f32 %v1246, %v1318
    %v1320 = vpop.f32.mrb[0].mxu0
    %1321 = vdwg.mxu0
    %v1322 = vld [vmem:[%s9] sm:$0x1]
    %v1324 = vlaneseq
    %v1325 = vshrl.u32 %v1324, 7
    %v1326 = vsub.s32 0, %v1325
    %v1327 = vrot.slane %v1322, %v1326
    %v1329 = vadd.f32 %v1319, %v1327
    %1330 = vst [vmem:[#allocation6] sm:$0xff] %v1329
    %v1331 = vld [vmem:[%s10] sm:$0x1f]
    %v1332 = vlaneseq
    %v1333 = vshrl.u32 %v1332, 7
    %v1334 = vlaneseq
    %v1335 = vand.u32 %v1334, 127
    %vm1336 = vcmp.eq.s32.totalorder %v1333, %v1335
    %vm1337 = vcmp.eq.s32.totalorder %v1333, 3
    %v1338 = vsel %vm1337, 0.0, -10000.0
    %v1339 = vadd.f32 %v1331, %v1338
    %vm1340 = vcmask 1044480
    %v1341 = vsel %vm1340, %v1339, -inf
    %v1342 = vrot.slane %v1341, 4
    %v1343 = vmax.f32 %v1341, %v1342
    %v1344 = vrot.slane %v1343, 2
    %v1345 = vmax.f32 %v1343, %v1344
    %v1346 = vrot.slane %v1345, 1
    %v1347 = vmax.f32 %v1345, %v1346
    %vm1348 = vcmp.eq.f32.partialorder %v1339, %v1347
    %v1349 = vsel %vm1348, %v1333, 5
    %v1350 = vsel %vm1340, %v1349, 2147483647
    %v1351 = vrot.slane %v1350, 4
    %vm1352 = vcmp.lt.s32.totalorder %v1350, %v1351
    %v1353 = vsel %vm1352, %v1350, %v1351
    %v1354 = vrot.slane %v1353, 2
    %vm1355 = vcmp.lt.s32.totalorder %v1353, %v1354
    %v1356 = vsel %vm1355, %v1353, %v1354
    %v1357 = vrot.slane %v1356, 1
    %vm1358 = vcmp.lt.s32.totalorder %v1356, %v1357
    %v1359 = vsel %vm1358, %v1356, %v1357
    %1360 = vst [vmem:[#allocation7] sm:$0x1] %v1359
    %v1361 = vld [vmem:[#allocation6] sm:$0x1]
    %v1362 = vadd.f32 %v1347, %v1361
    %v1363 = vlaneseq
    %v1364 = vshrl.u32 %v1363, 7
    %v1365 = vsub.s32 0, %v1364
    %v1366 = vrot.slane %v1362, %v1365
    %v1367 = vsel %vm1336, %v1366, 0.0
    %v1368 = vsel %vm1340, %v1367, 0.0
    %1369 = vadd.xlane.f32.xlu0 %v1368
    %v1370 = vpop.xlane.xlu0 %1369
    %v1371 = vadd.f32 %v1331, %v1370
    %v1372 = vsel %vm1340, %v1371, -inf
    %v1373 = vrot.slane %v1372, 4
    %v1374 = vmax.f32 %v1372, %v1373
    %v1375 = vrot.slane %v1374, 2
    %v1376 = vmax.f32 %v1374, %v1375
    %v1377 = vrot.slane %v1376, 1
    %v1378 = vmax.f32 %v1376, %v1377
    %vm1379 = vcmp.eq.f32.partialorder %v1371, %v1378
    %v1380 = vsel %vm1379, %v1333, 5
    %v1381 = vsel %vm1340, %v1380, 2147483647
    %v1382 = vrot.slane %v1381, 4
    %vm1383 = vcmp.lt.s32.totalorder %v1381, %v1382
    %v1384 = vsel %vm1383, %v1381, %v1382
    %v1385 = vrot.slane %v1384, 2
    %vm1386 = vcmp.lt.s32.totalorder %v1384, %v1385
    %v1387 = vsel %vm1386, %v1384, %v1385
    %v1388 = vrot.slane %v1387, 1
    %vm1389 = vcmp.lt.s32.totalorder %v1387, %v1388
    %v1390 = vsel %vm1389, %v1387, %v1388
    %1391 = vst [vmem:[#allocation7 + $0x1] sm:$0x1] %v1390
    %v1392 = vld [vmem:[#allocation6 + $0x1] sm:$0x1]
    %v1393 = vadd.f32 %v1378, %v1392
    %v1394 = vlaneseq
    %v1395 = vshrl.u32 %v1394, 7
    %v1396 = vsub.s32 0, %v1395
    %v1397 = vrot.slane %v1393, %v1396
    %v1398 = vsel %vm1336, %v1397, 0.0
    %v1399 = vsel %vm1340, %v1398, 0.0
    %1400 = vadd.xlane.f32.xlu0 %v1399
    %v1401 = vpop.xlane.xlu0 %1400
    %v1402 = vadd.f32 %v1331, %v1401
    %v1403 = vsel %vm1340, %v1402, -inf
    %v1404 = vrot.slane %v1403, 4
    %v1405 = vmax.f32 %v1403, %v1404
    %v1406 = vrot.slane %v1405, 2
    %v1407 = vmax.f32 %v1405, %v1406
    %v1408 = vrot.slane %v1407, 1
    %v1409 = vmax.f32 %v1407, %v1408
    %vm1410 = vcmp.eq.f32.partialorder %v1402, %v1409
    %v1411 = vsel %vm1410, %v1333, 5
    %v1412 = vsel %vm1340, %v1411, 2147483647
    %v1413 = vrot.slane %v1412, 4
    %vm1414 = vcmp.lt.s32.totalorder %v1412, %v1413
    %v1415 = vsel %vm1414, %v1412, %v1413
    %v1416 = vrot.slane %v1415, 2
    %vm1417 = vcmp.lt.s32.totalorder %v1415, %v1416
    %v1418 = vsel %vm1417, %v1415, %v1416
    %v1419 = vrot.slane %v1418, 1
    %vm1420 = vcmp.lt.s32.totalorder %v1418, %v1419
    %v1421 = vsel %vm1420, %v1418, %v1419
    %1422 = vst [vmem:[#allocation7 + $0x2] sm:$0x1] %v1421
    %v1423 = vld [vmem:[#allocation6 + $0x2] sm:$0x1]
    %v1424 = vadd.f32 %v1409, %v1423
    %v1425 = vlaneseq
    %v1426 = vshrl.u32 %v1425, 7
    %v1427 = vsub.s32 0, %v1426
    %v1428 = vrot.slane %v1424, %v1427
    %v1429 = vsel %vm1336, %v1428, 0.0
    %v1430 = vsel %vm1340, %v1429, 0.0
    %1431 = vadd.xlane.f32.xlu0 %v1430
    %v1432 = vpop.xlane.xlu0 %1431
    %v1433 = vadd.f32 %v1331, %v1432
    %v1434 = vsel %vm1340, %v1433, -inf
    %v1435 = vrot.slane %v1434, 4
    %v1436 = vmax.f32 %v1434, %v1435
    %v1437 = vrot.slane %v1436, 2
    %v1438 = vmax.f32 %v1436, %v1437
    %v1439 = vrot.slane %v1438, 1
    %v1440 = vmax.f32 %v1438, %v1439
    %vm1441 = vcmp.eq.f32.partialorder %v1433, %v1440
    %v1442 = vsel %vm1441, %v1333, 5
    %v1443 = vsel %vm1340, %v1442, 2147483647
    %v1444 = vrot.slane %v1443, 4
    %vm1445 = vcmp.lt.s32.totalorder %v1443, %v1444
    %v1446 = vsel %vm1445, %v1443, %v1444
    %v1447 = vrot.slane %v1446, 2
    %vm1448 = vcmp.lt.s32.totalorder %v1446, %v1447
    %v1449 = vsel %vm1448, %v1446, %v1447
    %v1450 = vrot.slane %v1449, 1
    %vm1451 = vcmp.lt.s32.totalorder %v1449, %v1450
    %v1452 = vsel %vm1451, %v1449, %v1450
    %1453 = vst [vmem:[#allocation7 + $0x3] sm:$0x1] %v1452
    %v1454 = vld [vmem:[#allocation6 + $0x3] sm:$0x1]
    %v1455 = vadd.f32 %v1440, %v1454
    %v1456 = vlaneseq
    %v1457 = vshrl.u32 %v1456, 7
    %v1458 = vsub.s32 0, %v1457
    %v1459 = vrot.slane %v1455, %v1458
    %v1460 = vsel %vm1336, %v1459, 0.0
    %v1461 = vsel %vm1340, %v1460, 0.0
    %1462 = vadd.xlane.f32.xlu0 %v1461
    %v1463 = vpop.xlane.xlu0 %1462
    %v1464 = vadd.f32 %v1331, %v1463
    %v1465 = vsel %vm1340, %v1464, -inf
    %v1466 = vrot.slane %v1465, 4
    %v1467 = vmax.f32 %v1465, %v1466
    %v1468 = vrot.slane %v1467, 2
    %v1469 = vmax.f32 %v1467, %v1468
    %v1470 = vrot.slane %v1469, 1
    %v1471 = vmax.f32 %v1469, %v1470
    %vm1472 = vcmp.eq.f32.partialorder %v1464, %v1471
    %v1473 = vsel %vm1472, %v1333, 5
    %v1474 = vsel %vm1340, %v1473, 2147483647
    %v1475 = vrot.slane %v1474, 4
    %vm1476 = vcmp.lt.s32.totalorder %v1474, %v1475
    %v1477 = vsel %vm1476, %v1474, %v1475
    %v1478 = vrot.slane %v1477, 2
    %vm1479 = vcmp.lt.s32.totalorder %v1477, %v1478
    %v1480 = vsel %vm1479, %v1477, %v1478
    %v1481 = vrot.slane %v1480, 1
    %vm1482 = vcmp.lt.s32.totalorder %v1480, %v1481
    %v1483 = vsel %vm1482, %v1480, %v1481
    %1484 = vst [vmem:[#allocation7 + $0x4] sm:$0x1] %v1483
    %v1485 = vld [vmem:[#allocation6 + $0x4] sm:$0x1]
    %v1486 = vadd.f32 %v1471, %v1485
    %v1487 = vlaneseq
    %v1488 = vshrl.u32 %v1487, 7
    %v1489 = vsub.s32 0, %v1488
    %v1490 = vrot.slane %v1486, %v1489
    %v1491 = vsel %vm1336, %v1490, 0.0
    %v1492 = vsel %vm1340, %v1491, 0.0
    %1493 = vadd.xlane.f32.xlu0 %v1492
    %v1494 = vpop.xlane.xlu0 %1493
    %v1495 = vadd.f32 %v1331, %v1494
    %v1496 = vsel %vm1340, %v1495, -inf
    %v1497 = vrot.slane %v1496, 4
    %v1498 = vmax.f32 %v1496, %v1497
    %v1499 = vrot.slane %v1498, 2
    %v1500 = vmax.f32 %v1498, %v1499
    %v1501 = vrot.slane %v1500, 1
    %v1502 = vmax.f32 %v1500, %v1501
    %vm1503 = vcmp.eq.f32.partialorder %v1495, %v1502
    %v1504 = vsel %vm1503, %v1333, 5
    %v1505 = vsel %vm1340, %v1504, 2147483647
    %v1506 = vrot.slane %v1505, 4
    %vm1507 = vcmp.lt.s32.totalorder %v1505, %v1506
    %v1508 = vsel %vm1507, %v1505, %v1506
    %v1509 = vrot.slane %v1508, 2
    %vm1510 = vcmp.lt.s32.totalorder %v1508, %v1509
    %v1511 = vsel %vm1510, %v1508, %v1509
    %v1512 = vrot.slane %v1511, 1
    %vm1513 = vcmp.lt.s32.totalorder %v1511, %v1512
    %v1514 = vsel %vm1513, %v1511, %v1512
    %1515 = vst [vmem:[#allocation7 + $0x5] sm:$0x1] %v1514
    %v1516 = vld [vmem:[#allocation6 + $0x5] sm:$0x1]
    %v1517 = vadd.f32 %v1502, %v1516
    %v1518 = vlaneseq
    %v1519 = vshrl.u32 %v1518, 7
    %v1520 = vsub.s32 0, %v1519
    %v1521 = vrot.slane %v1517, %v1520
    %v1522 = vsel %vm1336, %v1521, 0.0
    %v1523 = vsel %vm1340, %v1522, 0.0
    %1524 = vadd.xlane.f32.xlu0 %v1523
    %v1525 = vpop.xlane.xlu0 %1524
    %v1526 = vadd.f32 %v1331, %v1525
    %v1527 = vsel %vm1340, %v1526, -inf
    %v1528 = vrot.slane %v1527, 4
    %v1529 = vmax.f32 %v1527, %v1528
    %v1530 = vrot.slane %v1529, 2
    %v1531 = vmax.f32 %v1529, %v1530
    %v1532 = vrot.slane %v1531, 1
    %v1533 = vmax.f32 %v1531, %v1532
    %vm1534 = vcmp.eq.f32.partialorder %v1526, %v1533
    %v1535 = vsel %vm1534, %v1333, 5
    %v1536 = vsel %vm1340, %v1535, 2147483647
    %v1537 = vrot.slane %v1536, 4
    %vm1538 = vcmp.lt.s32.totalorder %v1536, %v1537
    %v1539 = vsel %vm1538, %v1536, %v1537
    %v1540 = vrot.slane %v1539, 2
    %vm1541 = vcmp.lt.s32.totalorder %v1539, %v1540
    %v1542 = vsel %vm1541, %v1539, %v1540
    %v1543 = vrot.slane %v1542, 1
    %vm1544 = vcmp.lt.s32.totalorder %v1542, %v1543
    %v1545 = vsel %vm1544, %v1542, %v1543
    %1546 = vst [vmem:[#allocation7 + $0x6] sm:$0x1] %v1545
    %v1547 = vld [vmem:[#allocation6 + $0x6] sm:$0x1]
    %v1548 = vadd.f32 %v1533, %v1547
    %v1549 = vlaneseq
    %v1550 = vshrl.u32 %v1549, 7
    %v1551 = vsub.s32 0, %v1550
    %v1552 = vrot.slane %v1548, %v1551
    %v1553 = vsel %vm1336, %v1552, 0.0
    %v1554 = vsel %vm1340, %v1553, 0.0
    %1555 = vadd.xlane.f32.xlu0 %v1554
    %v1556 = vpop.xlane.xlu0 %1555
    %v1557 = vadd.f32 %v1331, %v1556
    %v1558 = vsel %vm1340, %v1557, -inf
    %v1559 = vrot.slane %v1558, 4
    %v1560 = vmax.f32 %v1558, %v1559
    %v1561 = vrot.slane %v1560, 2
    %v1562 = vmax.f32 %v1560, %v1561
    %v1563 = vrot.slane %v1562, 1
    %v1564 = vmax.f32 %v1562, %v1563
    %vm1565 = vcmp.eq.f32.partialorder %v1557, %v1564
    %v1566 = vsel %vm1565, %v1333, 5
    %v1567 = vsel %vm1340, %v1566, 2147483647
    %v1568 = vrot.slane %v1567, 4
    %vm1569 = vcmp.lt.s32.totalorder %v1567, %v1568
    %v1570 = vsel %vm1569, %v1567, %v1568
    %v1571 = vrot.slane %v1570, 2
    %vm1572 = vcmp.lt.s32.totalorder %v1570, %v1571
    %v1573 = vsel %vm1572, %v1570, %v1571
    %v1574 = vrot.slane %v1573, 1
    %vm1575 = vcmp.lt.s32.totalorder %v1573, %v1574
    %v1576 = vsel %vm1575, %v1573, %v1574
    %1577 = vst [vmem:[#allocation7 + $0x7] sm:$0x1] %v1576
    %v1578 = vld [vmem:[#allocation6 + $0x7] sm:$0x1]
    %v1579 = vadd.f32 %v1564, %v1578
    %v1580 = vlaneseq
    %v1581 = vshrl.u32 %v1580, 7
    %v1582 = vsub.s32 0, %v1581
    %v1583 = vrot.slane %v1579, %v1582
    %v1584 = vsel %vm1336, %v1583, 0.0
    %v1585 = vsel %vm1340, %v1584, 0.0
    %1586 = vadd.xlane.f32.xlu0 %v1585
    %v1587 = vpop.xlane.xlu0 %1586
    %v1588 = vadd.f32 %v1587, %v1331
    %vm1589 = vcmask 36896
    %v1590 = vsel %vm1589, %v1588, -inf
    %v1591 = vrot.slane %v1590, 4
    %v1592 = vmax.f32 %v1590, %v1591
    %v1593 = vrot.slane %v1592, 2
    %v1594 = vmax.f32 %v1592, %v1593
    %v1595 = vrot.slane %v1594, 1
    %v1596 = vmax.f32 %v1594, %v1595
    %vm1597 = vcmp.eq.f32.partialorder %v1588, %v1596
    %v1598 = vsel %vm1597, %v1333, 5
    %v1599 = vsel %vm1589, %v1598, 2147483647
    %v1600 = vrot.slane %v1599, 4
    %vm1601 = vcmp.lt.s32.totalorder %v1599, %v1600
    %v1602 = vsel %vm1601, %v1599, %v1600
    %v1603 = vrot.slane %v1602, 2
    %vm1604 = vcmp.lt.s32.totalorder %v1602, %v1603
    %v1605 = vsel %vm1604, %v1602, %v1603
    %v1606 = vrot.slane %v1605, 1
    %vm1607 = vcmp.lt.s32.totalorder %v1605, %v1606
    %v1608 = vsel %vm1607, %v1605, %v1606
    %1610 = vrot.lane.b32.xlu0 %v1596, 124
    %v1611 = vpop.permute.xlu0 %1610
    %vm1613 = vcmask 0
    %1614 = vst.msk [vmem:[#allocation19] sm:$0x1] %vm1613, %v1611
    %1615 = vset.pattern.permute.xlu0 4
    %1616 = vperm.xlu0 %1615, %v1608
    %v1617 = vpop.permute.xlu0 %1616
    %1618 = vst [vmem:[#allocation22 + $0x7] sm:$0x1] %v1617
    %v1619 = vld [vmem:[#allocation7 + $0x7] sm:$0x1]
    %vm1620 = vcmp.eq.s32.totalorder %v1335, %v1617
    %v1621 = vsel %vm1620, %v1619, 0
    %vm1622 = vcmask 1040384
    %v1623 = vsel %vm1622, %v1621, 0
    %v1624 = vand.u32 %v1623, 65535
    %v1625 = vshrl.u32 %v1623, 16
    %v1626 = vcvt.s32.f32 %v1624
    %v1627 = vcvt.s32.f32 %v1625
    %1628 = vadd.xlane.f32.xlu0 %v1626
    %v1629 = vpop.xlane.xlu0 %1628
    %1630 = vadd.xlane.f32.xlu0 %v1627
    %v1631 = vpop.xlane.xlu0 %1630
    %v1632 = vcvt.f32.s32 %v1629
    %v1633 = vcvt.f32.s32 %v1631
    %v1634 = vshll.u32 %v1633, 16
    %v1635 = vadd.s32 %v1634, %v1632
    %1636 = vst [vmem:[#allocation22 + $0x6] sm:$0x1] %v1635
    %v1637 = vld [vmem:[#allocation7 + $0x6] sm:$0x1]
    %vm1638 = vcmp.eq.s32.totalorder %v1335, %v1635
    %v1639 = vsel %vm1638, %v1637, 0
    %v1640 = vsel %vm1622, %v1639, 0
    %v1641 = vand.u32 %v1640, 65535
    %v1642 = vshrl.u32 %v1640, 16
    %v1643 = vcvt.s32.f32 %v1641
    %v1644 = vcvt.s32.f32 %v1642
    %1645 = vadd.xlane.f32.xlu0 %v1643
    %v1646 = vpop.xlane.xlu0 %1645
    %1647 = vadd.xlane.f32.xlu0 %v1644
    %v1648 = vpop.xlane.xlu0 %1647
    %v1649 = vcvt.f32.s32 %v1646
    %v1650 = vcvt.f32.s32 %v1648
    %v1651 = vshll.u32 %v1650, 16
    %v1652 = vadd.s32 %v1651, %v1649
    %1653 = vst [vmem:[#allocation22 + $0x5] sm:$0x1] %v1652
    %v1654 = vld [vmem:[#allocation7 + $0x5] sm:$0x1]
    %vm1655 = vcmp.eq.s32.totalorder %v1335, %v1652
    %v1656 = vsel %vm1655, %v1654, 0
    %v1657 = vsel %vm1622, %v1656, 0
    %v1658 = vand.u32 %v1657, 65535
    %v1659 = vshrl.u32 %v1657, 16
    %v1660 = vcvt.s32.f32 %v1658
    %v1661 = vcvt.s32.f32 %v1659
    %1662 = vadd.xlane.f32.xlu0 %v1660
    %v1663 = vpop.xlane.xlu0 %1662
    %1664 = vadd.xlane.f32.xlu0 %v1661
    %v1665 = vpop.xlane.xlu0 %1664
    %v1666 = vcvt.f32.s32 %v1663
    %v1667 = vcvt.f32.s32 %v1665
    %v1668 = vshll.u32 %v1667, 16
    %v1669 = vadd.s32 %v1668, %v1666
    %1670 = vst [vmem:[#allocation22 + $0x4] sm:$0x1] %v1669
    %v1671 = vld [vmem:[#allocation7 + $0x4] sm:$0x1]
    %vm1672 = vcmp.eq.s32.totalorder %v1335, %v1669
    %v1673 = vsel %vm1672, %v1671, 0
    %v1674 = vsel %vm1622, %v1673, 0
    %v1675 = vand.u32 %v1674, 65535
    %v1676 = vshrl.u32 %v1674, 16
    %v1677 = vcvt.s32.f32 %v1675
    %v1678 = vcvt.s32.f32 %v1676
    %1679 = vadd.xlane.f32.xlu0 %v1677
    %v1680 = vpop.xlane.xlu0 %1679
    %1681 = vadd.xlane.f32.xlu0 %v1678
    %v1682 = vpop.xlane.xlu0 %1681
    %v1683 = vcvt.f32.s32 %v1680
    %v1684 = vcvt.f32.s32 %v1682
    %v1685 = vshll.u32 %v1684, 16
    %v1686 = vadd.s32 %v1685, %v1683
    %1687 = vst [vmem:[#allocation22 + $0x3] sm:$0x1] %v1686
    %v1688 = vld [vmem:[#allocation7 + $0x3] sm:$0x1]
    %vm1689 = vcmp.eq.s32.totalorder %v1335, %v1686
    %v1690 = vsel %vm1689, %v1688, 0
    %v1691 = vsel %vm1622, %v1690, 0
    %v1692 = vand.u32 %v1691, 65535
    %v1693 = vshrl.u32 %v1691, 16
    %v1694 = vcvt.s32.f32 %v1692
    %v1695 = vcvt.s32.f32 %v1693
    %1696 = vadd.xlane.f32.xlu0 %v1694
    %v1697 = vpop.xlane.xlu0 %1696
    %1698 = vadd.xlane.f32.xlu0 %v1695
    %v1699 = vpop.xlane.xlu0 %1698
    %v1700 = vcvt.f32.s32 %v1697
    %v1701 = vcvt.f32.s32 %v1699
    %v1702 = vshll.u32 %v1701, 16
    %v1703 = vadd.s32 %v1702, %v1700
    %1704 = vst [vmem:[#allocation22 + $0x2] sm:$0x1] %v1703
    %v1705 = vld [vmem:[#allocation7 + $0x2] sm:$0x1]
    %vm1706 = vcmp.eq.s32.totalorder %v1335, %v1703
    %v1707 = vsel %vm1706, %v1705, 0
    %v1708 = vsel %vm1622, %v1707, 0
    %v1709 = vand.u32 %v1708, 65535
    %v1710 = vshrl.u32 %v1708, 16
    %v1711 = vcvt.s32.f32 %v1709
    %v1712 = vcvt.s32.f32 %v1710
    %1713 = vadd.xlane.f32.xlu0 %v1711
    %v1714 = vpop.xlane.xlu0 %1713
    %1715 = vadd.xlane.f32.xlu0 %v1712
    %v1716 = vpop.xlane.xlu0 %1715
    %v1717 = vcvt.f32.s32 %v1714
    %v1718 = vcvt.f32.s32 %v1716
    %v1719 = vshll.u32 %v1718, 16
    %v1720 = vadd.s32 %v1719, %v1717
    %1721 = vst [vmem:[#allocation22 + $0x1] sm:$0x1] %v1720
    %v1722 = vld [vmem:[#allocation7 + $0x1] sm:$0x1]
    %vm1723 = vcmp.eq.s32.totalorder %v1335, %v1720
    %v1724 = vsel %vm1723, %v1722, 0
    %v1725 = vsel %vm1622, %v1724, 0
    %v1726 = vand.u32 %v1725, 65535
    %v1727 = vshrl.u32 %v1725, 16
    %v1728 = vcvt.s32.f32 %v1726
    %v1729 = vcvt.s32.f32 %v1727
    %1730 = vadd.xlane.f32.xlu0 %v1728
    %v1731 = vpop.xlane.xlu0 %1730
    %1732 = vadd.xlane.f32.xlu0 %v1729
    %v1733 = vpop.xlane.xlu0 %1732
    %v1734 = vcvt.f32.s32 %v1731
    %v1735 = vcvt.f32.s32 %v1733
    %v1736 = vshll.u32 %v1735, 16
    %v1737 = vadd.s32 %v1736, %v1734
    %1738 = vst [vmem:[#allocation22] sm:$0x1] %v1737
    %v1739 = vld [vmem:[#allocation7] sm:$0x1]
    %vm1740 = vcmp.eq.s32.totalorder %v1335, %v1737
    %v1741 = vsel %vm1740, %v1739, 0
    %v1742 = vsel %vm1622, %v1741, 0
    %v1743 = vand.u32 %v1742, 65535
    %v1744 = vshrl.u32 %v1742, 16
    %v1745 = vcvt.s32.f32 %v1743
    %v1746 = vcvt.s32.f32 %v1744
    %1747 = vadd.xlane.f32.xlu0 %v1745
    %v1748 = vpop.xlane.xlu0 %1747
    %1749 = vadd.xlane.f32.xlu0 %v1746
    %v1750 = vpop.xlane.xlu0 %1749
    %v1751 = vcvt.f32.s32 %v1748
    %v1752 = vcvt.f32.s32 %v1750
    %v1753 = vshll.u32 %v1752, 16
    %v1754 = vadd.s32 %v1753, %v1751
    %1755 = vst.msk [vmem:[#allocation20] sm:$0x1] %vm1613, %v1754
    // Predicated region
    $region70: #{tpu_custom_call.1} parent=1 // pred_check
      _
    $region71: #{tpu_custom_call.1} parent=1 // pred_check_branch
      %1757 = sbr.rel (0) target = $region73
    $region72: #{tpu_custom_call.1} parent=1 // pred_region
      %s1759 = ssub.s32 16, 16
      %1760 = vsyncadd [#allocation10], %s1759
      %s1762 = sshll.u32 [#allocation19], 4
      %s1763 = int_to_ptr.vmem [resolvable:$true] %s1762
      %1765 = dma.vmem_to_hbm [thread:$0]  %s1763, 16, %s11, [#allocation10]
    $region73: #{tpu_custom_call.1} parent=1 // pred_fallthru
      _
    // Predicated region
    $region74: #{tpu_custom_call.1} parent=1 // pred_check
      _
    $region75: #{tpu_custom_call.1} parent=1 // pred_check_branch
      %1767 = sbr.rel (0) target = $region77
    $region76: #{tpu_custom_call.1} parent=1 // pred_region
      %s1769 = ssub.s32 16, 16
      %1770 = vsyncadd [#allocation21], %s1769
      %s1772 = sshll.u32 [#allocation20], 4
      %s1773 = int_to_ptr.vmem [resolvable:$true] %s1772
      %1775 = dma.vmem_to_hbm [thread:$0]  %s1773, 16, %s12, [#allocation21]
    $region77: #{tpu_custom_call.1} parent=1 // pred_fallthru
      _
    // Predicated region
    $region78: #{tpu_custom_call.1} parent=1 // pred_check
      _
    $region79: #{tpu_custom_call.1} parent=1 // pred_check_branch
      %1777 = sbr.rel (0) target = $region81
    $region80: #{tpu_custom_call.1} parent=1 // pred_region
      %s1779 = ssub.s32 128, 128
      %1780 = vsyncadd [#allocation21], %s1779
      %s1782 = sshll.u32 [#allocation22], 4
      %s1783 = int_to_ptr.vmem [resolvable:$true] %s1782
      %1785 = dma.vmem_to_hbm [thread:$0]  %s1783, 128, %s13, [#allocation21]
    $region81: #{tpu_custom_call.1} parent=1 // pred_fallthru
      _
    // Predicated region
    $region82: #{tpu_custom_call.1} parent=1 // pred_check
      _
    $region83: #{tpu_custom_call.1} parent=1 // pred_check_branch
      %1787 = sbr.rel (0) target = $region85
    $region84: #{tpu_custom_call.1} parent=1 // pred_region
      %1788 = dma.done [#allocation10], 16
    $region85: #{tpu_custom_call.1} parent=1 // pred_fallthru
      _
    // Predicated region
    $region86: #{tpu_custom_call.1} parent=1 // pred_check
      _
    $region87: #{tpu_custom_call.1} parent=1 // pred_check_branch
      %1790 = sbr.rel (0) target = $region89
    $region88: #{tpu_custom_call.1} parent=1 // pred_region
      %1791 = dma.done [#allocation21], 16
    $region89: #{tpu_custom_call.1} parent=1 // pred_fallthru
      _
    // Predicated region
    $region90: #{tpu_custom_call.1} parent=1 // pred_check
      _
    $region91: #{tpu_custom_call.1} parent=1 // pred_check_branch
      %1793 = sbr.rel (0) target = $region93
    $region92: #{tpu_custom_call.1} parent=1 // pred_region
      %1794 = dma.done [#allocation21], 128
    $region93: #{tpu_custom_call.1} parent=1 // pred_fallthru
      _
    %1795 = vsyncpa [#allocation9], 1
    %1796 = vsyncpa [#allocation12], 1
    %1797 = vsyncpa [#allocation15], 1
    %1798 = vsyncpa [#allocation18], 1
    %1799 = vsyncpa [#allocation10], 1
    %1800 = vsyncpa [#allocation21], 1

</llo_original>
